<compile_context>
chip_gen: v7x
topology: tpu7x:2x2x1
jax: 0.10.0
libtpu: 0.0.40
codegen_flags: <defaults>
</compile_context>

<pallas_src>
import functools

import jax
import jax.numpy as jnp
from jax.experimental import pallas as pl
from jax.experimental.pallas import tpu as pltpu

LEAKY_SLOPE = 0.2


# --------------------------------------------------------------------------
# Stacked-K operand build: 9 shifted + border-masked slabs -> (9*C, N) bf16.
# --------------------------------------------------------------------------
def _stack_taps(slab_ref, mask_ref, im_w, off, npix):
    """Build the (9*C, npix) bf16 operand for a 3x3 "same" convolution.

    slab_ref : (C, pad_len) bf16 scratch.  The packed image data lives in
               lanes [off, off+npix); the (im_w+1)-lane halos on both sides
               are zero (zeroed by the caller every grid step).
    mask_ref : (9, npix) bf16 border masks, tap t = dy*3 + dx.  Each mask
               zeroes every output position whose (dy,dx)-shifted source lies
               outside its own image (top/bottom row, left/right column) —
               this also kills cross-image reads caused by lane packing.
    """
    taps = []
    for dy in range(3):
        for dx in range(3):
            t = dy * 3 + dx
            start = off + (dy - 1) * im_w + (dx - 1)       # static slice start
            xs = slab_ref[:, start:start + npix]           # (C, npix) bf16
            if t != 4:                                     # centre tap: no mask
                xs = xs * mask_ref[t:t + 1, :]
            taps.append(xs)
    return jnp.concatenate(taps, axis=0)                   # (9*C, npix)


# --------------------------------------------------------------------------
# Fused SCConv kernel: one grid step == B_TILE packed batch images.
# --------------------------------------------------------------------------
def _scconv_kernel(x_ref, pm_ref, um_ref, w_ref, b_ref, mask_ref, maskp_ref,
                   o_ref, slab_ref, slabp_ref,
                   *, im_w, im_ws, off, offp, npix, npix_s, approx_sigmoid):
    c = x_ref.shape[1]
    halo, halo_s = im_w + 1, im_ws + 1

    # Zero ONLY the halo lanes the tap slices can read; the interior
    # [off, off+npix) is fully overwritten below every step.  (Do NOT gate
    # this on program_id==0: with dimension_semantics=("parallel",) the
    # second TensorCore's first grid index is not 0 on v7x.)
    z = jnp.zeros((c, halo), jnp.bfloat16)
    slab_ref[:, off - halo:off] = z
    slab_ref[:, off + npix:off + npix + halo] = z
    zs = jnp.zeros((c, halo_s), jnp.bfloat16)
    slabp_ref[:, offp - halo_s:offp] = zs
    slabp_ref[:, offp + npix_s:offp + npix_s + halo_s] = zs

    x32 = x_ref[0]                                  # (C, npix) f32
    xb = x32.astype(jnp.bfloat16)

    # ---- k2 branch: avgpool -> conv3x3 @ low res -> nearest upsample.
    # Pool / upsample are matmuls with constant (block-diagonal over packed
    # images) matrices.  Fine at 16x16 demo sizes; for real rain100L patches
    # (e.g. 100x100) these should become in-kernel reductions instead.
    pooled = jnp.dot(xb, pm_ref[...], preferred_element_type=jnp.float32)
    slabp_ref[:, offp:offp + npix_s] = pooled.astype(jnp.bfloat16)
    op2 = _stack_taps(slabp_ref, maskp_ref, im_ws, offp, npix_s)
    y2 = jnp.dot(w_ref[0], op2, preferred_element_type=jnp.float32) + b_ref[0]
    up = jnp.dot(y2.astype(jnp.bfloat16), um_ref[...],
                 preferred_element_type=jnp.float32)        # (C, npix)

    # gate = sigmoid(x + up): EUP exp + approximate reciprocal (stable form).
    g = x32 + up
    eg = jnp.exp(-jnp.abs(g))
    if approx_sigmoid:
        inv = pl.reciprocal(1.0 + eg, approx=True)
    else:
        inv = 1.0 / (1.0 + eg)
    gate = jnp.where(g >= 0.0, inv, eg * inv)

    # ---- k3: conv3x3 on x, gated by the sigmoid.
    slab_ref[:, off:off + npix] = xb
    op3 = _stack_taps(slab_ref, mask_ref, im_w, off, npix)
    y3 = jnp.dot(w_ref[1], op3, preferred_element_type=jnp.float32) + b_ref[1]
    gated = (y3 * gate).astype(jnp.bfloat16)

    # ---- k4: conv3x3 + LeakyReLU(0.2).  Reuse the slab; halo stays zero.
    slab_ref[:, off:off + npix] = gated
    op4 = _stack_taps(slab_ref, mask_ref, im_w, off, npix)
    y4 = jnp.dot(w_ref[2], op4, preferred_element_type=jnp.float32) + b_ref[2]
    o_ref[0] = jnp.where(y4 >= 0.0, y4, LEAKY_SLOPE * y4).astype(o_ref.dtype)


# --------------------------------------------------------------------------
# Host-side constant builders.
# --------------------------------------------------------------------------
def _align128(v):
    return -(-v // 128) * 128


def _tap_masks(h, w, b_tile):
    """(9, b_tile*h*w) bf16 per-tap border masks (tap t = dy*3 + dx)."""
    y = jnp.arange(h * w) // w
    x = jnp.arange(h * w) % w
    masks = []
    for dy in range(3):
        for dx in range(3):
            m = jnp.ones((h * w,), jnp.float32)
            if dy == 0:
                m = m * (y != 0)
            if dy == 2:
                m = m * (y != h - 1)
            if dx == 0:
                m = m * (x != 0)
            if dx == 2:
                m = m * (x != w - 1)
            masks.append(m)
    m9 = jnp.stack(masks, axis=0)                            # (9, h*w)
    return jnp.tile(m9, (1, b_tile)).astype(jnp.bfloat16)    # per-image local masks


def _pool_up_mats(h, w, r, b_tile):
    """Block-diagonal (over packed images) avgpool / nearest-upsample mats."""
    hs, ws = h // r, w // r
    rows = jnp.arange(h) // r
    cols = jnp.arange(w) // r
    cell = (rows[:, None] * ws + cols[None, :]).reshape(h * w)       # (hw,)
    onehot = (cell[:, None] == jnp.arange(hs * ws)[None, :]).astype(jnp.float32)
    eye = jnp.eye(b_tile, dtype=jnp.float32)
    pool = jnp.kron(eye, onehot / float(r * r))     # (b*hw, b*hws)
    up = jnp.kron(eye, onehot.T)                    # (b*hws, b*hw)
    return pool.astype(jnp.bfloat16), up.astype(jnp.bfloat16)


def _prep_w(wk):
    # (Cout, Cin, 3, 3) -> (Cout, 9*Cin) bf16; column = (dy*3+dx)*Cin + cin,
    # matching the tap-major / channel-minor row order of _stack_taps.
    cout, cin = wk.shape[0], wk.shape[1]
    return jnp.transpose(wk, (0, 2, 3, 1)).reshape(cout, 9 * cin).astype(jnp.bfloat16)


def _default_b_tile(n, max_pack=4):
    """Largest pack <= max_pack that divides n and keeps the grid even
    (so v7x's two TensorCores both get work) when n is even."""
    best = 1
    for bt in range(1, min(n, max_pack) + 1):
        if n % bt:
            continue
        if n % 2 == 0 and (n // bt) % 2 != 0:
            continue
        best = bt
    return best


# --------------------------------------------------------------------------
# Wrapper.
# --------------------------------------------------------------------------
def scconv_forward(x, params, pooling_r=4, b_tile=None, approx_sigmoid=True):
    n, c, h, w = x.shape
    assert h % pooling_r == 0 and w % pooling_r == 0
    hs, ws = h // pooling_r, w // pooling_r
    hw, hws = h * w, hs * ws

    if b_tile is None:
        b_tile = _default_b_tile(n)
    assert n % b_tile == 0
    grid = n // b_tile
    npix, npix_s = b_tile * hw, b_tile * hws

    # Slab geometry: 128-aligned interior start, (w+1)-lane halo each side.
    off = max(128, _align128(w + 1))
    pad_len = _align128(off + npix + w + 1)
    offp = max(128, _align128(ws + 1))
    pad_len_p = _align128(offp + npix_s + ws + 1)

    pool_mat, up_mat = _pool_up_mats(h, w, pooling_r, b_tile)
    mask = _tap_masks(h, w, b_tile)
    maskp = _tap_masks(hs, ws, b_tile)

    w_all = jnp.stack([_prep_w(params["k2_w"]),
                       _prep_w(params["k3_w"]),
                       _prep_w(params["k4_w"])], axis=0)              # (3, C, 9C)
    b_all = jnp.stack([params["k2_b"], params["k3_b"], params["k4_b"]],
                      axis=0).reshape(3, c, 1).astype(jnp.float32)    # (3, C, 1)

    # Pack b_tile images along the lane axis: (grid, C, b_tile*H*W), lane-dense.
    x_packed = (x.astype(jnp.float32)
                 .reshape(grid, b_tile, c, hw)
                 .transpose(0, 2, 1, 3)
                 .reshape(grid, c, npix))

    kernel = functools.partial(
        _scconv_kernel, im_w=w, im_ws=ws, off=off, offp=offp,
        npix=npix, npix_s=npix_s, approx_sigmoid=approx_sigmoid)

    flops = int(grid * (2 * (9 * c) * c * (2 * npix + npix_s)     # three convs
                        + 2 * 2 * c * npix * npix_s))             # pool + upsample
    bytes_accessed = int(2 * n * c * hw * 4                       # x in + out write
                         + 3 * c * 9 * c * 2 + 3 * c * 4          # weights + bias
                         + 2 * npix * npix_s * 2                  # pool/up matrices
                         + 9 * (npix + npix_s) * 2)               # masks
    cost = pl.CostEstimate(flops=flops, transcendentals=int(n * c * hw),
                           bytes_accessed=bytes_accessed)

    out = pl.pallas_call(
        kernel,
        out_shape=jax.ShapeDtypeStruct((grid, c, npix), jnp.float32),
        grid_spec=pltpu.PrefetchScalarGridSpec(
            num_scalar_prefetch=0,
            grid=(grid,),
            in_specs=[
                pl.BlockSpec((1, c, npix), lambda i: (i, 0, 0)),      # packed x
                pl.BlockSpec((npix, npix_s), lambda i: (0, 0)),       # avgpool mat
                pl.BlockSpec((npix_s, npix), lambda i: (0, 0)),       # upsample mat
                pl.BlockSpec((3, c, 9 * c), lambda i: (0, 0, 0)),     # conv weights
                pl.BlockSpec((3, c, 1), lambda i: (0, 0, 0)),         # biases
                pl.BlockSpec((9, npix), lambda i: (0, 0)),            # tap masks
                pl.BlockSpec((9, npix_s), lambda i: (0, 0)),          # low-res masks
            ],
            out_specs=pl.BlockSpec((1, c, npix), lambda i: (i, 0, 0)),
            scratch_shapes=[
                pltpu.VMEM((c, pad_len), jnp.bfloat16),    # packed x / gated slab
                pltpu.VMEM((c, pad_len_p), jnp.bfloat16),  # packed pooled slab
            ],
        ),
        compiler_params=pltpu.CompilerParams(
            dimension_semantics=("parallel",)),
        cost_estimate=cost,
    )(x_packed, pool_mat, up_mat, w_all, b_all, mask, maskp)

    return (out.reshape(grid, c, b_tile, hw)
               .transpose(0, 2, 1, 3)
               .reshape(n, c, h, w))


# --------------------------------------------------------------------------
# Pure-JAX reference (sanity check against the PyTorch semantics).
# --------------------------------------------------------------------------
def _conv3x3_ref(x, wk, b):
    out = jax.lax.conv_general_dilated(
        x, wk, window_strides=(1, 1), padding=((1, 1), (1, 1)),
        dimension_numbers=("NCHW", "OIHW", "NCHW"))
    return out + b.reshape(1, -1, 1, 1)


def scconv_reference(x, params, pooling_r):
    r = pooling_r
    n, c, h, w = x.shape
    pooled = x.reshape(n, c, h // r, r, w // r, r).mean(axis=(3, 5))
    y2 = _conv3x3_ref(pooled, params["k2_w"], params["k2_b"])
    hi = jnp.arange(h) // r
    wi = jnp.arange(w) // r
    up = y2[:, :, hi[:, None], wi[None, :]]                 # nearest upsample
    gate = jax.nn.sigmoid(x + up)
    y3 = _conv3x3_ref(x, params["k3_w"], params["k3_b"])
    y4 = _conv3x3_ref(y3 * gate, params["k4_w"], params["k4_b"])
    return jnp.where(y4 >= 0, y4, LEAKY_SLOPE * y4)


# --------------------------------------------------------------------------
# Parameters.
# --------------------------------------------------------------------------
def init_params(key, planes):
    ks = jax.random.split(key, 6)

    def wgt(kk, shape):
        return (0.05 * jax.random.normal(kk, shape)).astype(jnp.float32)

    def bias(kk, m):
        return (0.01 * jax.random.normal(kk, (m,))).astype(jnp.float32)

    return dict(
        k2_w=wgt(ks[0], (planes, planes, 3, 3)), k2_b=bias(ks[1], planes),
        k3_w=wgt(ks[2], (planes, planes, 3, 3)), k3_b=bias(ks[3], planes),
        k4_w=wgt(ks[4], (planes, planes, 3, 3)), k4_b=bias(ks[5], planes),
    )


# --------------------------------------------------------------------------
if __name__ == "__main__":
    key = jax.random.PRNGKey(0)
    kx, kp = jax.random.split(key)

    planes, pooling_r = 16, 4
    # batch=4 so the batch-packing path is exercised (B_TILE=2, grid=2 -> even
    # grid keeps both v7x TensorCores busy).
    x = jax.random.normal(kx, (4, planes, 16, 16), dtype=jnp.float32)
    params = init_params(kp, planes)

    fwd = jax.jit(functools.partial(scconv_forward, pooling_r=pooling_r))
    y = fwd(x, params)
    jax.block_until_ready(y)

    assert y.shape == x.shape, y.shape
    assert bool(jnp.all(jnp.isfinite(y)))

    # Sanity check vs. pure-JAX reference (bf16 MXU + approx reciprocal => loose tol).
    y_ref = scconv_reference(x, params, pooling_r)
    max_err = float(jnp.max(jnp.abs(y - y_ref)))
    assert max_err < 1e-1, f"max abs err {max_err}"

    print("KERNEL_OK")
</pallas_src>

<mosaic_0001>
module attributes {stable_mosaic.version = 11 : i64} {
  func.func @_scconv_kernel(%arg0: i32, %arg1: memref<1x16x512xf32, #tpu.memory_space<vmem>>, %arg2: memref<512x32xbf16, #tpu.memory_space<vmem>>, %arg3: memref<32x512xbf16, #tpu.memory_space<vmem>>, %arg4: memref<3x16x144xbf16, #tpu.memory_space<vmem>>, %arg5: memref<3x16x1xf32, #tpu.memory_space<vmem>>, %arg6: memref<9x512xbf16, #tpu.memory_space<vmem>>, %arg7: memref<9x32xbf16, #tpu.memory_space<vmem>>, %arg8: memref<1x16x512xf32, #tpu.memory_space<vmem>>, %arg9: memref<16x768xbf16, #tpu.memory_space<vmem>>, %arg10: memref<16x256xbf16, #tpu.memory_space<vmem>>) attributes {dimension_semantics = [#tpu.dimension_semantics<parallel>], iteration_bounds = array<i64: 2>, scalar_prefetch = 0 : i64, scratch_operands = 2 : i64, tpu.core_type = #tpu.core_type<tc>, window_params = [{transform_indices = @transform_0, window_bounds = array<i64: 1, 16, 512>}, {pipeline_mode = #tpu.pipeline_mode<synchronous>, transform_indices = @transform_1, window_bounds = array<i64: 512, 32>}, {pipeline_mode = #tpu.pipeline_mode<synchronous>, transform_indices = @transform_2, window_bounds = array<i64: 32, 512>}, {pipeline_mode = #tpu.pipeline_mode<synchronous>, transform_indices = @transform_3, window_bounds = array<i64: 3, 16, 144>}, {pipeline_mode = #tpu.pipeline_mode<synchronous>, transform_indices = @transform_4, window_bounds = array<i64: 3, 16, 1>}, {pipeline_mode = #tpu.pipeline_mode<synchronous>, transform_indices = @transform_5, window_bounds = array<i64: 9, 512>}, {pipeline_mode = #tpu.pipeline_mode<synchronous>, transform_indices = @transform_6, window_bounds = array<i64: 9, 32>}, {transform_indices = @transform_7, window_bounds = array<i64: 1, 16, 512>}]} {
    %cst = arith.constant 0.000000e+00 : bf16
    %0 = vector.broadcast %cst : bf16 to vector<16x17xbf16>
    %c0 = arith.constant 0 : index
    %c111 = arith.constant 111 : index
    %1 = vector.load %arg9[%c0, %c111] : memref<16x768xbf16, #tpu.memory_space<vmem>>, vector<16x17xbf16>
    tpu.vector_store %arg9[%c0, %c111], %0 {strides = array<i32>} : memref<16x768xbf16, #tpu.memory_space<vmem>>, vector<16x17xbf16>,
    %c0_0 = arith.constant 0 : index
    %c640 = arith.constant 640 : index
    %2 = vector.load %arg9[%c0_0, %c640] : memref<16x768xbf16, #tpu.memory_space<vmem>>, vector<16x17xbf16>
    tpu.vector_store %arg9[%c0_0, %c640], %0 {strides = array<i32>} : memref<16x768xbf16, #tpu.memory_space<vmem>>, vector<16x17xbf16>,
    %cst_1 = arith.constant 0.000000e+00 : bf16
    %3 = vector.broadcast %cst_1 : bf16 to vector<16x5xbf16>
    %c0_2 = arith.constant 0 : index
    %c123 = arith.constant 123 : index
    %4 = vector.load %arg10[%c0_2, %c123] : memref<16x256xbf16, #tpu.memory_space<vmem>>, vector<16x5xbf16>
    tpu.vector_store %arg10[%c0_2, %c123], %3 {strides = array<i32>} : memref<16x256xbf16, #tpu.memory_space<vmem>>, vector<16x5xbf16>,
    %c0_3 = arith.constant 0 : index
    %c160 = arith.constant 160 : index
    %5 = vector.load %arg10[%c0_3, %c160] : memref<16x256xbf16, #tpu.memory_space<vmem>>, vector<16x5xbf16>
    tpu.vector_store %arg10[%c0_3, %c160], %3 {strides = array<i32>} : memref<16x256xbf16, #tpu.memory_space<vmem>>, vector<16x5xbf16>,
    %c0_4 = arith.constant 0 : index
    %c0_5 = arith.constant 0 : index
    %c0_6 = arith.constant 0 : index
    %6 = vector.load %arg1[%c0_4, %c0_5, %c0_6] : memref<1x16x512xf32, #tpu.memory_space<vmem>>, vector<1x16x512xf32>
    %7 = vector.shape_cast %6 : vector<1x16x512xf32> to vector<16x512xf32>
    %8 = arith.truncf %7 : vector<16x512xf32> to vector<16x512xbf16>
    %c0_7 = arith.constant 0 : index
    %c0_8 = arith.constant 0 : index
    %9 = vector.load %arg2[%c0_7, %c0_8] : memref<512x32xbf16, #tpu.memory_space<vmem>>, vector<512x32xbf16>
    %cst_9 = arith.constant dense<0.000000e+00> : vector<16x32xf32>
    %10 = tpu.matmul %8, %9, %cst_9 {dimension_numbers = #tpu.dot_dimension_numbers<[1], [0], [0], [1], [0, 0, 1, 1], [], []>} : vector<16x512xbf16>, vector<512x32xbf16>, vector<16x32xf32> -> vector<16x32xf32>
    %11 = arith.truncf %10 : vector<16x32xf32> to vector<16x32xbf16>
    %c0_10 = arith.constant 0 : index
    %c128 = arith.constant 128 : index
    %12 = vector.load %arg10[%c0_10, %c128] : memref<16x256xbf16, #tpu.memory_space<vmem>>, vector<16x32xbf16>
    tpu.vector_store %arg10[%c0_10, %c128], %11 {strides = array<i32>} : memref<16x256xbf16, #tpu.memory_space<vmem>>, vector<16x32xbf16>,
    %c0_11 = arith.constant 0 : index
    %c123_12 = arith.constant 123 : index
    %13 = vector.load %arg10[%c0_11, %c123_12] : memref<16x256xbf16, #tpu.memory_space<vmem>>, vector<16x32xbf16>
    %c0_13 = arith.constant 0 : index
    %c0_14 = arith.constant 0 : index
    %14 = vector.load %arg7[%c0_13, %c0_14] : memref<9x32xbf16, #tpu.memory_space<vmem>>, vector<1x32xbf16>
    %15 = vector.broadcast %14 : vector<1x32xbf16> to vector<16x32xbf16>
    %16 = arith.mulf %13, %15 : vector<16x32xbf16>
    %c0_15 = arith.constant 0 : index
    %c124 = arith.constant 124 : index
    %17 = vector.load %arg10[%c0_15, %c124] : memref<16x256xbf16, #tpu.memory_space<vmem>>, vector<16x32xbf16>
    %c1 = arith.constant 1 : index
    %c0_16 = arith.constant 0 : index
    %18 = vector.load %arg7[%c1, %c0_16] : memref<9x32xbf16, #tpu.memory_space<vmem>>, vector<1x32xbf16>
    %19 = vector.broadcast %18 : vector<1x32xbf16> to vector<16x32xbf16>
    %20 = arith.mulf %17, %19 : vector<16x32xbf16>
    %c0_17 = arith.constant 0 : index
    %c125 = arith.constant 125 : index
    %21 = vector.load %arg10[%c0_17, %c125] : memref<16x256xbf16, #tpu.memory_space<vmem>>, vector<16x32xbf16>
    %c2 = arith.constant 2 : index
    %c0_18 = arith.constant 0 : index
    %22 = vector.load %arg7[%c2, %c0_18] : memref<9x32xbf16, #tpu.memory_space<vmem>>, vector<1x32xbf16>
    %23 = vector.broadcast %22 : vector<1x32xbf16> to vector<16x32xbf16>
    %24 = arith.mulf %21, %23 : vector<16x32xbf16>
    %c0_19 = arith.constant 0 : index
    %c127 = arith.constant 127 : index
    %25 = vector.load %arg10[%c0_19, %c127] : memref<16x256xbf16, #tpu.memory_space<vmem>>, vector<16x32xbf16>
    %c3 = arith.constant 3 : index
    %c0_20 = arith.constant 0 : index
    %26 = vector.load %arg7[%c3, %c0_20] : memref<9x32xbf16, #tpu.memory_space<vmem>>, vector<1x32xbf16>
    %27 = vector.broadcast %26 : vector<1x32xbf16> to vector<16x32xbf16>
    %28 = arith.mulf %25, %27 : vector<16x32xbf16>
    %c0_21 = arith.constant 0 : index
    %c128_22 = arith.constant 128 : index
    %29 = vector.load %arg10[%c0_21, %c128_22] : memref<16x256xbf16, #tpu.memory_space<vmem>>, vector<16x32xbf16>
    %c0_23 = arith.constant 0 : index
    %c129 = arith.constant 129 : index
    %30 = vector.load %arg10[%c0_23, %c129] : memref<16x256xbf16, #tpu.memory_space<vmem>>, vector<16x32xbf16>
    %c5 = arith.constant 5 : index
    %c0_24 = arith.constant 0 : index
    %31 = vector.load %arg7[%c5, %c0_24] : memref<9x32xbf16, #tpu.memory_space<vmem>>, vector<1x32xbf16>
    %32 = vector.broadcast %31 : vector<1x32xbf16> to vector<16x32xbf16>
    %33 = arith.mulf %30, %32 : vector<16x32xbf16>
    %c0_25 = arith.constant 0 : index
    %c131 = arith.constant 131 : index
    %34 = vector.load %arg10[%c0_25, %c131] : memref<16x256xbf16, #tpu.memory_space<vmem>>, vector<16x32xbf16>
    %c6 = arith.constant 6 : index
    %c0_26 = arith.constant 0 : index
    %35 = vector.load %arg7[%c6, %c0_26] : memref<9x32xbf16, #tpu.memory_space<vmem>>, vector<1x32xbf16>
    %36 = vector.broadcast %35 : vector<1x32xbf16> to vector<16x32xbf16>
    %37 = arith.mulf %34, %36 : vector<16x32xbf16>
    %c0_27 = arith.constant 0 : index
    %c132 = arith.constant 132 : index
    %38 = vector.load %arg10[%c0_27, %c132] : memref<16x256xbf16, #tpu.memory_space<vmem>>, vector<16x32xbf16>
    %c7 = arith.constant 7 : index
    %c0_28 = arith.constant 0 : index
    %39 = vector.load %arg7[%c7, %c0_28] : memref<9x32xbf16, #tpu.memory_space<vmem>>, vector<1x32xbf16>
    %40 = vector.broadcast %39 : vector<1x32xbf16> to vector<16x32xbf16>
    %41 = arith.mulf %38, %40 : vector<16x32xbf16>
    %c0_29 = arith.constant 0 : index
    %c133 = arith.constant 133 : index
    %42 = vector.load %arg10[%c0_29, %c133] : memref<16x256xbf16, #tpu.memory_space<vmem>>, vector<16x32xbf16>
    %c8 = arith.constant 8 : index
    %c0_30 = arith.constant 0 : index
    %43 = vector.load %arg7[%c8, %c0_30] : memref<9x32xbf16, #tpu.memory_space<vmem>>, vector<1x32xbf16>
    %44 = vector.broadcast %43 : vector<1x32xbf16> to vector<16x32xbf16>
    %45 = arith.mulf %42, %44 : vector<16x32xbf16>
    %46 = tpu.concatenate %16, %20, %24, %28, %29, %33, %37, %41, %45 in 0 : vector<16x32xbf16>, vector<16x32xbf16>, vector<16x32xbf16>, vector<16x32xbf16>, vector<16x32xbf16>, vector<16x32xbf16>, vector<16x32xbf16>, vector<16x32xbf16>, vector<16x32xbf16> -> vector<144x32xbf16>
    %c0_31 = arith.constant 0 : index
    %c0_32 = arith.constant 0 : index
    %c0_33 = arith.constant 0 : index
    %47 = vector.load %arg4[%c0_31, %c0_32, %c0_33] : memref<3x16x144xbf16, #tpu.memory_space<vmem>>, vector<1x16x144xbf16>
    %48 = vector.shape_cast %47 : vector<1x16x144xbf16> to vector<16x144xbf16>
    %cst_34 = arith.constant dense<0.000000e+00> : vector<16x32xf32>
    %49 = tpu.matmul %48, %46, %cst_34 {dimension_numbers = #tpu.dot_dimension_numbers<[1], [0], [0], [1], [0, 0, 1, 1], [], []>} : vector<16x144xbf16>, vector<144x32xbf16>, vector<16x32xf32> -> vector<16x32xf32>
    %c0_35 = arith.constant 0 : index
    %c0_36 = arith.constant 0 : index
    %c0_37 = arith.constant 0 : index
    %50 = vector.load %arg5[%c0_35, %c0_36, %c0_37] : memref<3x16x1xf32, #tpu.memory_space<vmem>>, vector<1x16x1xf32>
    %51 = vector.shape_cast %50 : vector<1x16x1xf32> to vector<16x1xf32>
    %52 = vector.broadcast %51 : vector<16x1xf32> to vector<16x32xf32>
    %53 = arith.addf %49, %52 : vector<16x32xf32>
    %54 = arith.truncf %53 : vector<16x32xf32> to vector<16x32xbf16>
    %c0_38 = arith.constant 0 : index
    %c0_39 = arith.constant 0 : index
    %55 = vector.load %arg3[%c0_38, %c0_39] : memref<32x512xbf16, #tpu.memory_space<vmem>>, vector<32x512xbf16>
    %cst_40 = arith.constant dense<0.000000e+00> : vector<16x512xf32>
    %56 = tpu.matmul %54, %55, %cst_40 {dimension_numbers = #tpu.dot_dimension_numbers<[1], [0], [0], [1], [0, 0, 1, 1], [], []>} : vector<16x32xbf16>, vector<32x512xbf16>, vector<16x512xf32> -> vector<16x512xf32>
    %57 = arith.addf %7, %56 : vector<16x512xf32>
    %58 = math.absf %57 : vector<16x512xf32>
    %cst_41 = arith.constant 0.000000e+00 : f32
    %59 = vector.broadcast %cst_41 : f32 to vector<16x512xf32>
    %60 = arith.subf %59, %58 : vector<16x512xf32>
    %61 = math.exp %60 : vector<16x512xf32>
    %cst_42 = arith.constant 1.000000e+00 : f32
    %62 = vector.broadcast %cst_42 : f32 to vector<16x512xf32>
    %63 = arith.addf %62, %61 : vector<16x512xf32>
    %64 = tpu.reciprocal %63 {approx = true} : vector<16x512xf32> -> vector<16x512xf32>
    %cst_43 = arith.constant 0.000000e+00 : f32
    %65 = vector.broadcast %cst_43 : f32 to vector<16x512xf32>
    %66 = arith.cmpf oge, %57, %65 : vector<16x512xf32>
    %67 = arith.mulf %61, %64 : vector<16x512xf32>
    %68 = arith.select %66, %64, %67 : vector<16x512xi1>, vector<16x512xf32>
    %c0_44 = arith.constant 0 : index
    %c128_45 = arith.constant 128 : index
    %69 = vector.load %arg9[%c0_44, %c128_45] : memref<16x768xbf16, #tpu.memory_space<vmem>>, vector<16x512xbf16>
    tpu.vector_store %arg9[%c0_44, %c128_45], %8 {strides = array<i32>} : memref<16x768xbf16, #tpu.memory_space<vmem>>, vector<16x512xbf16>,
    %c0_46 = arith.constant 0 : index
    %c111_47 = arith.constant 111 : index
    %70 = vector.load %arg9[%c0_46, %c111_47] : memref<16x768xbf16, #tpu.memory_space<vmem>>, vector<16x512xbf16>
    %c0_48 = arith.constant 0 : index
    %c0_49 = arith.constant 0 : index
    %71 = vector.load %arg6[%c0_48, %c0_49] : memref<9x512xbf16, #tpu.memory_space<vmem>>, vector<1x512xbf16>
    %72 = vector.broadcast %71 : vector<1x512xbf16> to vector<16x512xbf16>
    %73 = arith.mulf %70, %72 : vector<16x512xbf16>
    %c0_50 = arith.constant 0 : index
    %c112 = arith.constant 112 : index
    %74 = vector.load %arg9[%c0_50, %c112] : memref<16x768xbf16, #tpu.memory_space<vmem>>, vector<16x512xbf16>
    %c1_51 = arith.constant 1 : index
    %c0_52 = arith.constant 0 : index
    %75 = vector.load %arg6[%c1_51, %c0_52] : memref<9x512xbf16, #tpu.memory_space<vmem>>, vector<1x512xbf16>
    %76 = vector.broadcast %75 : vector<1x512xbf16> to vector<16x512xbf16>
    %77 = arith.mulf %74, %76 : vector<16x512xbf16>
    %c0_53 = arith.constant 0 : index
    %c113 = arith.constant 113 : index
    %78 = vector.load %arg9[%c0_53, %c113] : memref<16x768xbf16, #tpu.memory_space<vmem>>, vector<16x512xbf16>
    %c2_54 = arith.constant 2 : index
    %c0_55 = arith.constant 0 : index
    %79 = vector.load %arg6[%c2_54, %c0_55] : memref<9x512xbf16, #tpu.memory_space<vmem>>, vector<1x512xbf16>
    %80 = vector.broadcast %79 : vector<1x512xbf16> to vector<16x512xbf16>
    %81 = arith.mulf %78, %80 : vector<16x512xbf16>
    %c0_56 = arith.constant 0 : index
    %c127_57 = arith.constant 127 : index
    %82 = vector.load %arg9[%c0_56, %c127_57] : memref<16x768xbf16, #tpu.memory_space<vmem>>, vector<16x512xbf16>
    %c3_58 = arith.constant 3 : index
    %c0_59 = arith.constant 0 : index
    %83 = vector.load %arg6[%c3_58, %c0_59] : memref<9x512xbf16, #tpu.memory_space<vmem>>, vector<1x512xbf16>
    %84 = vector.broadcast %83 : vector<1x512xbf16> to vector<16x512xbf16>
    %85 = arith.mulf %82, %84 : vector<16x512xbf16>
    %c0_60 = arith.constant 0 : index
    %c128_61 = arith.constant 128 : index
    %86 = vector.load %arg9[%c0_60, %c128_61] : memref<16x768xbf16, #tpu.memory_space<vmem>>, vector<16x512xbf16>
    %c0_62 = arith.constant 0 : index
    %c129_63 = arith.constant 129 : index
    %87 = vector.load %arg9[%c0_62, %c129_63] : memref<16x768xbf16, #tpu.memory_space<vmem>>, vector<16x512xbf16>
    %c5_64 = arith.constant 5 : index
    %c0_65 = arith.constant 0 : index
    %88 = vector.load %arg6[%c5_64, %c0_65] : memref<9x512xbf16, #tpu.memory_space<vmem>>, vector<1x512xbf16>
    %89 = vector.broadcast %88 : vector<1x512xbf16> to vector<16x512xbf16>
    %90 = arith.mulf %87, %89 : vector<16x512xbf16>
    %c0_66 = arith.constant 0 : index
    %c143 = arith.constant 143 : index
    %91 = vector.load %arg9[%c0_66, %c143] : memref<16x768xbf16, #tpu.memory_space<vmem>>, vector<16x512xbf16>
    %c6_67 = arith.constant 6 : index
    %c0_68 = arith.constant 0 : index
    %92 = vector.load %arg6[%c6_67, %c0_68] : memref<9x512xbf16, #tpu.memory_space<vmem>>, vector<1x512xbf16>
    %93 = vector.broadcast %92 : vector<1x512xbf16> to vector<16x512xbf16>
    %94 = arith.mulf %91, %93 : vector<16x512xbf16>
    %c0_69 = arith.constant 0 : index
    %c144 = arith.constant 144 : index
    %95 = vector.load %arg9[%c0_69, %c144] : memref<16x768xbf16, #tpu.memory_space<vmem>>, vector<16x512xbf16>
    %c7_70 = arith.constant 7 : index
    %c0_71 = arith.constant 0 : index
    %96 = vector.load %arg6[%c7_70, %c0_71] : memref<9x512xbf16, #tpu.memory_space<vmem>>, vector<1x512xbf16>
    %97 = vector.broadcast %96 : vector<1x512xbf16> to vector<16x512xbf16>
    %98 = arith.mulf %95, %97 : vector<16x512xbf16>
    %c0_72 = arith.constant 0 : index
    %c145 = arith.constant 145 : index
    %99 = vector.load %arg9[%c0_72, %c145] : memref<16x768xbf16, #tpu.memory_space<vmem>>, vector<16x512xbf16>
    %c8_73 = arith.constant 8 : index
    %c0_74 = arith.constant 0 : index
    %100 = vector.load %arg6[%c8_73, %c0_74] : memref<9x512xbf16, #tpu.memory_space<vmem>>, vector<1x512xbf16>
    %101 = vector.broadcast %100 : vector<1x512xbf16> to vector<16x512xbf16>
    %102 = arith.mulf %99, %101 : vector<16x512xbf16>
    %103 = tpu.concatenate %73, %77, %81, %85, %86, %90, %94, %98, %102 in 0 : vector<16x512xbf16>, vector<16x512xbf16>, vector<16x512xbf16>, vector<16x512xbf16>, vector<16x512xbf16>, vector<16x512xbf16>, vector<16x512xbf16>, vector<16x512xbf16>, vector<16x512xbf16> -> vector<144x512xbf16>
    %c1_75 = arith.constant 1 : index
    %c0_76 = arith.constant 0 : index
    %c0_77 = arith.constant 0 : index
    %104 = vector.load %arg4[%c1_75, %c0_76, %c0_77] : memref<3x16x144xbf16, #tpu.memory_space<vmem>>, vector<1x16x144xbf16>
    %105 = vector.shape_cast %104 : vector<1x16x144xbf16> to vector<16x144xbf16>
    %cst_78 = arith.constant dense<0.000000e+00> : vector<16x512xf32>
    %106 = tpu.matmul %105, %103, %cst_78 {dimension_numbers = #tpu.dot_dimension_numbers<[1], [0], [0], [1], [0, 0, 1, 1], [], []>} : vector<16x144xbf16>, vector<144x512xbf16>, vector<16x512xf32> -> vector<16x512xf32>
    %c1_79 = arith.constant 1 : index
    %c0_80 = arith.constant 0 : index
    %c0_81 = arith.constant 0 : index
    %107 = vector.load %arg5[%c1_79, %c0_80, %c0_81] : memref<3x16x1xf32, #tpu.memory_space<vmem>>, vector<1x16x1xf32>
    %108 = vector.shape_cast %107 : vector<1x16x1xf32> to vector<16x1xf32>
    %109 = vector.broadcast %108 : vector<16x1xf32> to vector<16x512xf32>
    %110 = arith.addf %106, %109 : vector<16x512xf32>
    %111 = arith.mulf %110, %68 : vector<16x512xf32>
    %112 = arith.truncf %111 : vector<16x512xf32> to vector<16x512xbf16>
    %c0_82 = arith.constant 0 : index
    %c128_83 = arith.constant 128 : index
    %113 = vector.load %arg9[%c0_82, %c128_83] : memref<16x768xbf16, #tpu.memory_space<vmem>>, vector<16x512xbf16>
    tpu.vector_store %arg9[%c0_82, %c128_83], %112 {strides = array<i32>} : memref<16x768xbf16, #tpu.memory_space<vmem>>, vector<16x512xbf16>,
    %c0_84 = arith.constant 0 : index
    %c111_85 = arith.constant 111 : index
    %114 = vector.load %arg9[%c0_84, %c111_85] : memref<16x768xbf16, #tpu.memory_space<vmem>>, vector<16x512xbf16>
    %c0_86 = arith.constant 0 : index
    %c0_87 = arith.constant 0 : index
    %115 = vector.load %arg6[%c0_86, %c0_87] : memref<9x512xbf16, #tpu.memory_space<vmem>>, vector<1x512xbf16>
    %116 = vector.broadcast %115 : vector<1x512xbf16> to vector<16x512xbf16>
    %117 = arith.mulf %114, %116 : vector<16x512xbf16>
    %c0_88 = arith.constant 0 : index
    %c112_89 = arith.constant 112 : index
    %118 = vector.load %arg9[%c0_88, %c112_89] : memref<16x768xbf16, #tpu.memory_space<vmem>>, vector<16x512xbf16>
    %c1_90 = arith.constant 1 : index
    %c0_91 = arith.constant 0 : index
    %119 = vector.load %arg6[%c1_90, %c0_91] : memref<9x512xbf16, #tpu.memory_space<vmem>>, vector<1x512xbf16>
    %120 = vector.broadcast %119 : vector<1x512xbf16> to vector<16x512xbf16>
    %121 = arith.mulf %118, %120 : vector<16x512xbf16>
    %c0_92 = arith.constant 0 : index
    %c113_93 = arith.constant 113 : index
    %122 = vector.load %arg9[%c0_92, %c113_93] : memref<16x768xbf16, #tpu.memory_space<vmem>>, vector<16x512xbf16>
    %c2_94 = arith.constant 2 : index
    %c0_95 = arith.constant 0 : index
    %123 = vector.load %arg6[%c2_94, %c0_95] : memref<9x512xbf16, #tpu.memory_space<vmem>>, vector<1x512xbf16>
    %124 = vector.broadcast %123 : vector<1x512xbf16> to vector<16x512xbf16>
    %125 = arith.mulf %122, %124 : vector<16x512xbf16>
    %c0_96 = arith.constant 0 : index
    %c127_97 = arith.constant 127 : index
    %126 = vector.load %arg9[%c0_96, %c127_97] : memref<16x768xbf16, #tpu.memory_space<vmem>>, vector<16x512xbf16>
    %c3_98 = arith.constant 3 : index
    %c0_99 = arith.constant 0 : index
    %127 = vector.load %arg6[%c3_98, %c0_99] : memref<9x512xbf16, #tpu.memory_space<vmem>>, vector<1x512xbf16>
    %128 = vector.broadcast %127 : vector<1x512xbf16> to vector<16x512xbf16>
    %129 = arith.mulf %126, %128 : vector<16x512xbf16>
    %c0_100 = arith.constant 0 : index
    %c128_101 = arith.constant 128 : index
    %130 = vector.load %arg9[%c0_100, %c128_101] : memref<16x768xbf16, #tpu.memory_space<vmem>>, vector<16x512xbf16>
    %c0_102 = arith.constant 0 : index
    %c129_103 = arith.constant 129 : index
    %131 = vector.load %arg9[%c0_102, %c129_103] : memref<16x768xbf16, #tpu.memory_space<vmem>>, vector<16x512xbf16>
    %c5_104 = arith.constant 5 : index
    %c0_105 = arith.constant 0 : index
    %132 = vector.load %arg6[%c5_104, %c0_105] : memref<9x512xbf16, #tpu.memory_space<vmem>>, vector<1x512xbf16>
    %133 = vector.broadcast %132 : vector<1x512xbf16> to vector<16x512xbf16>
    %134 = arith.mulf %131, %133 : vector<16x512xbf16>
    %c0_106 = arith.constant 0 : index
    %c143_107 = arith.constant 143 : index
    %135 = vector.load %arg9[%c0_106, %c143_107] : memref<16x768xbf16, #tpu.memory_space<vmem>>, vector<16x512xbf16>
    %c6_108 = arith.constant 6 : index
    %c0_109 = arith.constant 0 : index
    %136 = vector.load %arg6[%c6_108, %c0_109] : memref<9x512xbf16, #tpu.memory_space<vmem>>, vector<1x512xbf16>
    %137 = vector.broadcast %136 : vector<1x512xbf16> to vector<16x512xbf16>
    %138 = arith.mulf %135, %137 : vector<16x512xbf16>
    %c0_110 = arith.constant 0 : index
    %c144_111 = arith.constant 144 : index
    %139 = vector.load %arg9[%c0_110, %c144_111] : memref<16x768xbf16, #tpu.memory_space<vmem>>, vector<16x512xbf16>
    %c7_112 = arith.constant 7 : index
    %c0_113 = arith.constant 0 : index
    %140 = vector.load %arg6[%c7_112, %c0_113] : memref<9x512xbf16, #tpu.memory_space<vmem>>, vector<1x512xbf16>
    %141 = vector.broadcast %140 : vector<1x512xbf16> to vector<16x512xbf16>
    %142 = arith.mulf %139, %141 : vector<16x512xbf16>
    %c0_114 = arith.constant 0 : index
    %c145_115 = arith.constant 145 : index
    %143 = vector.load %arg9[%c0_114, %c145_115] : memref<16x768xbf16, #tpu.memory_space<vmem>>, vector<16x512xbf16>
    %c8_116 = arith.constant 8 : index
    %c0_117 = arith.constant 0 : index
    %144 = vector.load %arg6[%c8_116, %c0_117] : memref<9x512xbf16, #tpu.memory_space<vmem>>, vector<1x512xbf16>
    %145 = vector.broadcast %144 : vector<1x512xbf16> to vector<16x512xbf16>
    %146 = arith.mulf %143, %145 : vector<16x512xbf16>
    %147 = tpu.concatenate %117, %121, %125, %129, %130, %134, %138, %142, %146 in 0 : vector<16x512xbf16>, vector<16x512xbf16>, vector<16x512xbf16>, vector<16x512xbf16>, vector<16x512xbf16>, vector<16x512xbf16>, vector<16x512xbf16>, vector<16x512xbf16>, vector<16x512xbf16> -> vector<144x512xbf16>
    %c2_118 = arith.constant 2 : index
    %c0_119 = arith.constant 0 : index
    %c0_120 = arith.constant 0 : index
    %148 = vector.load %arg4[%c2_118, %c0_119, %c0_120] : memref<3x16x144xbf16, #tpu.memory_space<vmem>>, vector<1x16x144xbf16>
    %149 = vector.shape_cast %148 : vector<1x16x144xbf16> to vector<16x144xbf16>
    %cst_121 = arith.constant dense<0.000000e+00> : vector<16x512xf32>
    %150 = tpu.matmul %149, %147, %cst_121 {dimension_numbers = #tpu.dot_dimension_numbers<[1], [0], [0], [1], [0, 0, 1, 1], [], []>} : vector<16x144xbf16>, vector<144x512xbf16>, vector<16x512xf32> -> vector<16x512xf32>
    %c2_122 = arith.constant 2 : index
    %c0_123 = arith.constant 0 : index
    %c0_124 = arith.constant 0 : index
    %151 = vector.load %arg5[%c2_122, %c0_123, %c0_124] : memref<3x16x1xf32, #tpu.memory_space<vmem>>, vector<1x16x1xf32>
    %152 = vector.shape_cast %151 : vector<1x16x1xf32> to vector<16x1xf32>
    %153 = vector.broadcast %152 : vector<16x1xf32> to vector<16x512xf32>
    %154 = arith.addf %150, %153 : vector<16x512xf32>
    %cst_125 = arith.constant 0.000000e+00 : f32
    %155 = vector.broadcast %cst_125 : f32 to vector<16x512xf32>
    %156 = arith.cmpf oge, %154, %155 : vector<16x512xf32>
    %cst_126 = arith.constant 2.000000e-01 : f32
    %157 = vector.broadcast %cst_126 : f32 to vector<16x512xf32>
    %158 = arith.mulf %157, %154 : vector<16x512xf32>
    %159 = arith.select %156, %154, %158 : vector<16x512xi1>, vector<16x512xf32>
    %c0_127 = arith.constant 0 : index
    %c0_128 = arith.constant 0 : index
    %c0_129 = arith.constant 0 : index
    %160 = vector.load %arg8[%c0_127, %c0_128, %c0_129] : memref<1x16x512xf32, #tpu.memory_space<vmem>>, vector<1x16x512xf32>
    %161 = vector.shape_cast %160 : vector<1x16x512xf32> to vector<16x512xf32>
    %162 = vector.shape_cast %159 : vector<16x512xf32> to vector<1x16x512xf32>
    tpu.vector_store %arg8[%c0_127, %c0_128, %c0_129], %162 {strides = array<i32>} : memref<1x16x512xf32, #tpu.memory_space<vmem>>, vector<1x16x512xf32>,
    return
  }
  func.func @transform_0(%arg0: i32) -> (i32, i32, i32) {
    %c0_i32 = arith.constant 0 : i32
    %c0_i32_0 = arith.constant 0 : i32
    %c0_i32_1 = arith.constant 0 : i32
    return %arg0, %c0_i32, %c0_i32_0 : i32, i32, i32
  }
  func.func @transform_1(%arg0: i32) -> (i32, i32) {
    %c0_i32 = arith.constant 0 : i32
    %c0_i32_0 = arith.constant 0 : i32
    %c0_i32_1 = arith.constant 0 : i32
    return %c0_i32, %c0_i32_0 : i32, i32
  }
  func.func @transform_2(%arg0: i32) -> (i32, i32) {
    %c0_i32 = arith.constant 0 : i32
    %c0_i32_0 = arith.constant 0 : i32
    %c0_i32_1 = arith.constant 0 : i32
    return %c0_i32, %c0_i32_0 : i32, i32
  }
  func.func @transform_3(%arg0: i32) -> (i32, i32, i32) {
    %c0_i32 = arith.constant 0 : i32
    %c0_i32_0 = arith.constant 0 : i32
    %c0_i32_1 = arith.constant 0 : i32
    %c0_i32_2 = arith.constant 0 : i32
    return %c0_i32, %c0_i32_0, %c0_i32_1 : i32, i32, i32
  }
  func.func @transform_4(%arg0: i32) -> (i32, i32, i32) {
    %c0_i32 = arith.constant 0 : i32
    %c0_i32_0 = arith.constant 0 : i32
    %c0_i32_1 = arith.constant 0 : i32
    %c0_i32_2 = arith.constant 0 : i32
    return %c0_i32, %c0_i32_0, %c0_i32_1 : i32, i32, i32
  }
  func.func @transform_5(%arg0: i32) -> (i32, i32) {
    %c0_i32 = arith.constant 0 : i32
    %c0_i32_0 = arith.constant 0 : i32
    %c0_i32_1 = arith.constant 0 : i32
    return %c0_i32, %c0_i32_0 : i32, i32
  }
  func.func @transform_6(%arg0: i32) -> (i32, i32) {
    %c0_i32 = arith.constant 0 : i32
    %c0_i32_0 = arith.constant 0 : i32
    %c0_i32_1 = arith.constant 0 : i32
    return %c0_i32, %c0_i32_0 : i32, i32
  }
  func.func @transform_7(%arg0: i32) -> (i32, i32, i32) {
    %c0_i32 = arith.constant 0 : i32
    %c0_i32_0 = arith.constant 0 : i32
    %c0_i32_1 = arith.constant 0 : i32
    return %arg0, %c0_i32, %c0_i32_0 : i32, i32, i32
  }
}

</mosaic_0001>

<llo_original>
// kernel: scconv_forward.1
$region0: #{scconv_forward.1}
  #allocation0 [shape = 'u32[]', space=smem, size = 0x4, offset = 0x4, fixed_abs, tag = 'smem constant byte address 0x4 - core index']
  #allocation1 [shape = 'u32[144,128]{1,0:T(1,128)}', space=vmem, size = 0x12000, scoped, tag = 'internal scratch']
  #allocation2 [shape = 'bf16[16,768]{1,0:T(16,128)(2,1)}', space=vmem, size = 0x6000, scoped, tag = 'scratch operand']
  #allocation3 [shape = 'bf16[16,256]{1,0:T(16,128)(2,1)}', space=vmem, size = 0x2000, scoped, tag = 'scratch operand']
  %s0 = inlined_call_operand.vmem [shape: f32[2,16,512], index: 0, kind: input, shape index: {}]
  %s1 = inlined_call_operand.vmem [shape: bf16[512,32], index: 1, kind: input, shape index: {}]
  %s2 = inlined_call_operand.vmem [shape: bf16[32,512], index: 2, kind: input, shape index: {}]
  %s3 = inlined_call_operand.vmem [shape: bf16[3,16,144], index: 3, kind: input, shape index: {}]
  %s4 = inlined_call_operand.vmem [shape: f32[3,16,1], index: 4, kind: input, shape index: {}]
  %s5 = inlined_call_operand.vmem [shape: bf16[9,512], index: 5, kind: input, shape index: {}]
  %s6 = inlined_call_operand.vmem [shape: bf16[9,32], index: 6, kind: input, shape index: {}]
  %s7 = inlined_call_operand.vmem [shape: f32[2,16,512], index: 7, kind: output, shape index: {}]
  %s8 = sld [smem:[#allocation0]]
  $region61: #{scconv_forward.1} parent=0
    _
  %s10 = ssub.s32 1, %s8
  %s11 = scalar_select 0, %s10, %s8
  loop: start=0, step=1, limit=4
  $region2: #{scconv_forward.1} parent=0 // loop_pre_header
    _
  $region3: #{scconv_forward.1} parent=0 // loop_header
    %s13 = sphi 0, %s17
    %p14 = scmp.ge.s32.totalorder %s13, 4
    %s23 = sphi 0, %s25
    %s26 = sphi 0, %s23
    %s27 = sphi 0, %s26
    %s43 = sphi 0, %s27
    %s47 = sphi 0, %s47
    %s49 = sphi 0, %s47
    %s50 = sphi 0, %s49
    %s64 = sphi 0, %s50
    %s68 = sphi 0, %s68
    %s70 = sphi 0, %s68
    %s71 = sphi 0, %s70
    %s85 = sphi 0, %s71
    %s89 = sphi 0, %s89
    %s91 = sphi 0, %s89
    %s92 = sphi 0, %s91
    %s106 = sphi 0, %s92
    %s110 = sphi 0, %s110
    %s112 = sphi 0, %s110
    %s113 = sphi 0, %s112
    %s127 = sphi 0, %s113
    %s131 = sphi 0, %s131
    %s133 = sphi 0, %s131
    %s134 = sphi 0, %s133
    %s148 = sphi 0, %s134
    %s152 = sphi 0, %s152
    %s154 = sphi 0, %s152
    %s155 = sphi 0, %s154
    %s169 = sphi 0, %s155
    %s175 = sphi 0, %s177
    %s178 = sphi 0, %s175
    %s179 = sphi 0, %s178
    %s195 = sphi 0, %s179
  $region4: #{scconv_forward.1} parent=0 // loop_header_branch
    %16 = sbr.rel (%p14) target = $region8
  $region5: #{scconv_forward.1} parent=0 // loop_body
    %s18 = ssub.s32 %s13, 1
    %s19 = ssub.s32 %s13, 2
    %s20 = sadd.s32 %s13, 1
    %s21 = ssub.s32 %s13, %s20
    %p22 = scmp.eq.s32.totalorder %s21, 0
    %s24 = sadd.s32 %s23, 1
    %s25 = scalar_select %p22, %s23, %s24
    %p28 = pneg %p22
    %p29 = scmp.eq.s32.totalorder %s13, 1
    %p30 = por %p28, %p29
    %p31 = scmp.ne.s32.totalorder %s23, %s26
    %p32 = scmp.eq.s32.totalorder %s13, 0
    %p33 = por %p31, %p32
    %p34 = scmp.ne.s32.totalorder %s23, %s26
    %p35 = scmp.eq.s32.totalorder %s18, 1
    %p36 = por %p34, %p35
    %p37 = scmp.ne.s32.totalorder %s26, %s27
    %p38 = scmp.eq.s32.totalorder %s18, 0
    %p39 = por %p37, %p38
    %p40 = scmp.ne.s32.totalorder %s26, %s27
    %p41 = scmp.eq.s32.totalorder %s19, 1
    %p42 = por %p40, %p41
    %p44 = scmp.ne.s32.totalorder %s27, %s43
    %p45 = scmp.eq.s32.totalorder %s19, 0
    %p46 = por %p44, %p45
    %s48 = sadd.s32 %s47, 1
    %p51 = scmp.eq.s32.totalorder %s13, 1
    %p52 = scmp.ne.s32.totalorder %s47, %s49
    %p53 = scmp.eq.s32.totalorder %s13, 0
    %p54 = por %p52, %p53
    %p55 = scmp.ne.s32.totalorder %s47, %s49
    %p56 = scmp.eq.s32.totalorder %s18, 1
    %p57 = por %p55, %p56
    %p58 = scmp.ne.s32.totalorder %s49, %s50
    %p59 = scmp.eq.s32.totalorder %s18, 0
    %p60 = por %p58, %p59
    %p61 = scmp.ne.s32.totalorder %s49, %s50
    %p62 = scmp.eq.s32.totalorder %s19, 1
    %p63 = por %p61, %p62
    %p65 = scmp.ne.s32.totalorder %s50, %s64
    %p66 = scmp.eq.s32.totalorder %s19, 0
    %p67 = por %p65, %p66
    %s69 = sadd.s32 %s68, 1
    %p72 = scmp.eq.s32.totalorder %s13, 1
    %p73 = scmp.ne.s32.totalorder %s68, %s70
    %p74 = scmp.eq.s32.totalorder %s13, 0
    %p75 = por %p73, %p74
    %p76 = scmp.ne.s32.totalorder %s68, %s70
    %p77 = scmp.eq.s32.totalorder %s18, 1
    %p78 = por %p76, %p77
    %p79 = scmp.ne.s32.totalorder %s70, %s71
    %p80 = scmp.eq.s32.totalorder %s18, 0
    %p81 = por %p79, %p80
    %p82 = scmp.ne.s32.totalorder %s70, %s71
    %p83 = scmp.eq.s32.totalorder %s19, 1
    %p84 = por %p82, %p83
    %p86 = scmp.ne.s32.totalorder %s71, %s85
    %p87 = scmp.eq.s32.totalorder %s19, 0
    %p88 = por %p86, %p87
    %s90 = sadd.s32 %s89, 1
    %p93 = scmp.eq.s32.totalorder %s13, 1
    %p94 = scmp.ne.s32.totalorder %s89, %s91
    %p95 = scmp.eq.s32.totalorder %s13, 0
    %p96 = por %p94, %p95
    %p97 = scmp.ne.s32.totalorder %s89, %s91
    %p98 = scmp.eq.s32.totalorder %s18, 1
    %p99 = por %p97, %p98
    %p100 = scmp.ne.s32.totalorder %s91, %s92
    %p101 = scmp.eq.s32.totalorder %s18, 0
    %p102 = por %p100, %p101
    %p103 = scmp.ne.s32.totalorder %s91, %s92
    %p104 = scmp.eq.s32.totalorder %s19, 1
    %p105 = por %p103, %p104
    %p107 = scmp.ne.s32.totalorder %s92, %s106
    %p108 = scmp.eq.s32.totalorder %s19, 0
    %p109 = por %p107, %p108
    %s111 = sadd.s32 %s110, 1
    %p114 = scmp.eq.s32.totalorder %s13, 1
    %p115 = scmp.ne.s32.totalorder %s110, %s112
    %p116 = scmp.eq.s32.totalorder %s13, 0
    %p117 = por %p115, %p116
    %p118 = scmp.ne.s32.totalorder %s110, %s112
    %p119 = scmp.eq.s32.totalorder %s18, 1
    %p120 = por %p118, %p119
    %p121 = scmp.ne.s32.totalorder %s112, %s113
    %p122 = scmp.eq.s32.totalorder %s18, 0
    %p123 = por %p121, %p122
    %p124 = scmp.ne.s32.totalorder %s112, %s113
    %p125 = scmp.eq.s32.totalorder %s19, 1
    %p126 = por %p124, %p125
    %p128 = scmp.ne.s32.totalorder %s113, %s127
    %p129 = scmp.eq.s32.totalorder %s19, 0
    %p130 = por %p128, %p129
    %s132 = sadd.s32 %s131, 1
    %p135 = scmp.eq.s32.totalorder %s13, 1
    %p136 = scmp.ne.s32.totalorder %s131, %s133
    %p137 = scmp.eq.s32.totalorder %s13, 0
    %p138 = por %p136, %p137
    %p139 = scmp.ne.s32.totalorder %s131, %s133
    %p140 = scmp.eq.s32.totalorder %s18, 1
    %p141 = por %p139, %p140
    %p142 = scmp.ne.s32.totalorder %s133, %s134
    %p143 = scmp.eq.s32.totalorder %s18, 0
    %p144 = por %p142, %p143
    %p145 = scmp.ne.s32.totalorder %s133, %s134
    %p146 = scmp.eq.s32.totalorder %s19, 1
    %p147 = por %p145, %p146
    %p149 = scmp.ne.s32.totalorder %s134, %s148
    %p150 = scmp.eq.s32.totalorder %s19, 0
    %p151 = por %p149, %p150
    %s153 = sadd.s32 %s152, 1
    %p156 = scmp.eq.s32.totalorder %s13, 1
    %p157 = scmp.ne.s32.totalorder %s152, %s154
    %p158 = scmp.eq.s32.totalorder %s13, 0
    %p159 = por %p157, %p158
    %p160 = scmp.ne.s32.totalorder %s152, %s154
    %p161 = scmp.eq.s32.totalorder %s18, 1
    %p162 = por %p160, %p161
    %p163 = scmp.ne.s32.totalorder %s154, %s155
    %p164 = scmp.eq.s32.totalorder %s18, 0
    %p165 = por %p163, %p164
    %p166 = scmp.ne.s32.totalorder %s154, %s155
    %p167 = scmp.eq.s32.totalorder %s19, 1
    %p168 = por %p166, %p167
    %p170 = scmp.ne.s32.totalorder %s155, %s169
    %p171 = scmp.eq.s32.totalorder %s19, 0
    %p172 = por %p170, %p171
    %s173 = ssub.s32 %s13, %s20
    %p174 = scmp.eq.s32.totalorder %s173, 0
    %s176 = sadd.s32 %s175, 1
    %s177 = scalar_select %p174, %s175, %s176
    %p180 = pneg %p174
    %p181 = scmp.eq.s32.totalorder %s13, 1
    %p182 = por %p180, %p181
    %p183 = scmp.ne.s32.totalorder %s175, %s178
    %p184 = scmp.eq.s32.totalorder %s13, 0
    %p185 = por %p183, %p184
    %p186 = scmp.ne.s32.totalorder %s175, %s178
    %p187 = scmp.eq.s32.totalorder %s18, 1
    %p188 = por %p186, %p187
    %p189 = scmp.ne.s32.totalorder %s178, %s179
    %p190 = scmp.eq.s32.totalorder %s18, 0
    %p191 = por %p189, %p190
    %p192 = scmp.ne.s32.totalorder %s178, %s179
    %p193 = scmp.eq.s32.totalorder %s19, 1
    %p194 = por %p192, %p193
    %p196 = scmp.ne.s32.totalorder %s179, %s195
    %p197 = scmp.eq.s32.totalorder %s19, 0
    %p198 = por %p196, %p197
    %p199 = scmp.le.s32.totalorder 1, %s13
    %p200 = scmp.lt.s32.totalorder %s13, 3
    %p201 = pnand %p199, %p200
    %p202 = pneg %p201
    // Predicated region
    $region9: #{scconv_forward.1} parent=5 // pred_check
      _
    $region10: #{scconv_forward.1} parent=5 // pred_check_branch
      %204 = sbr.rel (%p201) target = $region12
    $region11: #{scconv_forward.1} parent=5 // pred_region
      %s205 = ssub.s32 %s13, 1
      // Predicated region
      $region13: #{scconv_forward.1} parent=11 // pred_check
        %p206 = pneg %p60
      $region14: #{scconv_forward.1} parent=11 // pred_check_branch
        %208 = sbr.rel (%p206) target = $region16
      $region15: #{scconv_forward.1} parent=11 // pred_region
        _
      $region16: #{scconv_forward.1} parent=11 // pred_fallthru
        _
      // Predicated region
      $region17: #{scconv_forward.1} parent=11 // pred_check
        %p209 = pneg %p81
      $region18: #{scconv_forward.1} parent=11 // pred_check_branch
        %211 = sbr.rel (%p209) target = $region20
      $region19: #{scconv_forward.1} parent=11 // pred_region
        _
      $region20: #{scconv_forward.1} parent=11 // pred_fallthru
        _
      // Predicated region
      $region21: #{scconv_forward.1} parent=11 // pred_check
        %p212 = pneg %p102
      $region22: #{scconv_forward.1} parent=11 // pred_check_branch
        %214 = sbr.rel (%p212) target = $region24
      $region23: #{scconv_forward.1} parent=11 // pred_region
        _
      $region24: #{scconv_forward.1} parent=11 // pred_fallthru
        _
      // Predicated region
      $region25: #{scconv_forward.1} parent=11 // pred_check
        %p215 = pneg %p123
      $region26: #{scconv_forward.1} parent=11 // pred_check_branch
        %217 = sbr.rel (%p215) target = $region28
      $region27: #{scconv_forward.1} parent=11 // pred_region
        _
      $region28: #{scconv_forward.1} parent=11 // pred_fallthru
        _
      // Predicated region
      $region29: #{scconv_forward.1} parent=11 // pred_check
        %p218 = pneg %p144
      $region30: #{scconv_forward.1} parent=11 // pred_check_branch
        %220 = sbr.rel (%p218) target = $region32
      $region31: #{scconv_forward.1} parent=11 // pred_region
        _
      $region32: #{scconv_forward.1} parent=11 // pred_fallthru
        _
      // Predicated region
      $region33: #{scconv_forward.1} parent=11 // pred_check
        %p221 = pneg %p165
      $region34: #{scconv_forward.1} parent=11 // pred_check_branch
        %223 = sbr.rel (%p221) target = $region36
      $region35: #{scconv_forward.1} parent=11 // pred_region
        _
      $region36: #{scconv_forward.1} parent=11 // pred_fallthru
        _
    $region12: #{scconv_forward.1} parent=5 // pred_fallthru
      _
    %p224 = scmp.lt.s32.totalorder %s13, 2
    // Predicated region
    $region37: #{scconv_forward.1} parent=5 // pred_check
      %p225 = pneg %p224
    $region38: #{scconv_forward.1} parent=5 // pred_check_branch
      %227 = sbr.rel (%p225) target = $region40
    $region39: #{scconv_forward.1} parent=5 // pred_region
      // Predicated region
      $region41: #{scconv_forward.1} parent=39 // pred_check
        %p228 = pneg %p33
      $region42: #{scconv_forward.1} parent=39 // pred_check_branch
        %230 = sbr.rel (%p228) target = $region44
      $region43: #{scconv_forward.1} parent=39 // pred_region
        %p231 = scmp.lt.s32.totalorder %s13, 1
        %s232 = scalar_select %p231, %s13, 1
        %s233 = smul.addr %s232, 8
        %s234 = smul.addr %s233, 8
        %s235 = scalar_lea.vmem %s0, %s234
      $region44: #{scconv_forward.1} parent=39 // pred_fallthru
        _
    $region40: #{scconv_forward.1} parent=5 // pred_fallthru
      _
    %p236 = scmp.le.s32.totalorder 1, %s13
    %p237 = scmp.lt.s32.totalorder %s13, 3
    %p238 = pnand %p236, %p237
    %p239 = pneg %p238
    // Predicated region
    $region45: #{scconv_forward.1} parent=5 // pred_check
      _
    $region46: #{scconv_forward.1} parent=5 // pred_check_branch
      %241 = sbr.rel (%p238) target = $region48
    $region47: #{scconv_forward.1} parent=5 // pred_region
      %s242 = ssub.s32 %s13, 1
      %p243 = scmp.lt.s32.totalorder %s18, 1
      %s244 = scalar_select %p243, %s18, 1
      %s245 = smul.addr %s244, 8
      %s246 = smul.addr %s245, 8
      %s247 = scalar_lea.vmem %s0, %s246
      %p248 = pneg %p39
      %p249 = pneg %p36
      %p250 = pneg %p60
      %p251 = pneg %p57
      %p252 = pneg %p81
      %p253 = pneg %p78
      %p254 = pneg %p102
      %p255 = pneg %p99
      %p256 = pneg %p123
      %p257 = pneg %p120
      %p258 = pneg %p144
      %p259 = pneg %p141
      %p260 = pneg %p165
      %p261 = pneg %p162
      %p262 = pneg %p191
      %p263 = pneg %p188
      %p264 = scmp.lt.s32.totalorder %s18, 1
      %s265 = scalar_select %p264, %s18, 1
      %s266 = smul.addr %s265, 8
      %s267 = smul.addr %s266, 8
      %s268 = scalar_lea.vmem %s7, %s267
      %p269 = scmp.lt.s32.totalorder %s18, 1
      %s270 = scalar_select %p269, %s18, 1
      %s271 = smul.addr %s270, 8
      %s272 = smul.addr %s271, 8
      %s273 = scalar_lea.vmem %s0, %s272
      %p274 = scmp.lt.s32.totalorder %s18, 1
      %s275 = scalar_select %p274, %s18, 1
      %s276 = smul.addr %s275, 8
      %s277 = smul.addr %s276, 8
      %s278 = scalar_lea.vmem %s7, %s277
      %vm280 = vcmask 1048440
      %281 = vst.msk [vmem:[#allocation2] sm:$0xff] %vm280, 0
      %vm282 = vcmask 138240
      %283 = vst.msk [vmem:[#allocation2 + $0x28] sm:$0xff] %vm282, 0
      %vm284 = vcmask 1048536
      %285 = vst.msk [vmem:[#allocation3] sm:$0xff] %vm284, 0
      %vm286 = vcmask 302336
      %287 = vst.msk [vmem:[#allocation3 + $0x8] sm:$0xff] %vm286, 0
      %v288 = vld [vmem:[%s273] sm:$0xff]
      %v289 = vld [vmem:[%s273 + $0x8] sm:$0xff]
      %v290 = vld [vmem:[%s273 + $0x10] sm:$0xff]
      %v291 = vld [vmem:[%s273 + $0x18] sm:$0xff]
      %v292 = vld [vmem:[%s273 + $0x20] sm:$0xff]
      %v293 = vld [vmem:[%s273 + $0x28] sm:$0xff]
      %v294 = vld [vmem:[%s273 + $0x30] sm:$0xff]
      %v295 = vld [vmem:[%s273 + $0x38] sm:$0xff]
      %v296 = vpack.c.bf16 %v292, %v288
      %v297 = vpack.c.bf16 %v293, %v289
      %v298 = vpack.c.bf16 %v294, %v290
      %v299 = vpack.c.bf16 %v295, %v291
      %v300 = vld [vmem:[%s1] sm:$0xf]
      %v301 = vld [vmem:[%s1 + $0x4] sm:$0xf]
      %v302 = vld [vmem:[%s1 + $0x8] sm:$0xf]
      %v303 = vld [vmem:[%s1 + $0xc] sm:$0xf]
      %v304 = vld [vmem:[%s1 + $0x10] sm:$0xf]
      %v305 = vld [vmem:[%s1 + $0x14] sm:$0xf]
      %v306 = vld [vmem:[%s1 + $0x18] sm:$0xf]
      %v307 = vld [vmem:[%s1 + $0x1c] sm:$0xf]
      %v308 = vld [vmem:[%s1 + $0x20] sm:$0xf]
      %v309 = vld [vmem:[%s1 + $0x24] sm:$0xf]
      %v310 = vld [vmem:[%s1 + $0x28] sm:$0xf]
      %v311 = vld [vmem:[%s1 + $0x2c] sm:$0xf]
      %v312 = vld [vmem:[%s1 + $0x30] sm:$0xf]
      %v313 = vld [vmem:[%s1 + $0x34] sm:$0xf]
      %v314 = vld [vmem:[%s1 + $0x38] sm:$0xf]
      %v315 = vld [vmem:[%s1 + $0x3c] sm:$0xf]
      %v316 = vld [vmem:[%s1 + $0x40] sm:$0xf]
      %v317 = vld [vmem:[%s1 + $0x44] sm:$0xf]
      %v318 = vld [vmem:[%s1 + $0x48] sm:$0xf]
      %v319 = vld [vmem:[%s1 + $0x4c] sm:$0xf]
      %v320 = vld [vmem:[%s1 + $0x50] sm:$0xf]
      %v321 = vld [vmem:[%s1 + $0x54] sm:$0xf]
      %v322 = vld [vmem:[%s1 + $0x58] sm:$0xf]
      %v323 = vld [vmem:[%s1 + $0x5c] sm:$0xf]
      %v324 = vld [vmem:[%s1 + $0x60] sm:$0xf]
      %v325 = vld [vmem:[%s1 + $0x64] sm:$0xf]
      %v326 = vld [vmem:[%s1 + $0x68] sm:$0xf]
      %v327 = vld [vmem:[%s1 + $0x6c] sm:$0xf]
      %v328 = vld [vmem:[%s1 + $0x70] sm:$0xf]
      %v329 = vld [vmem:[%s1 + $0x74] sm:$0xf]
      %v330 = vld [vmem:[%s1 + $0x78] sm:$0xf]
      %v331 = vld [vmem:[%s1 + $0x7c] sm:$0xf]
      %v332 = vld [vmem:[%s1 + $0x80] sm:$0xf]
      %v333 = vld [vmem:[%s1 + $0x84] sm:$0xf]
      %v334 = vld [vmem:[%s1 + $0x88] sm:$0xf]
      %v335 = vld [vmem:[%s1 + $0x8c] sm:$0xf]
      %v336 = vld [vmem:[%s1 + $0x90] sm:$0xf]
      %v337 = vld [vmem:[%s1 + $0x94] sm:$0xf]
      %v338 = vld [vmem:[%s1 + $0x98] sm:$0xf]
      %v339 = vld [vmem:[%s1 + $0x9c] sm:$0xf]
      %v340 = vld [vmem:[%s1 + $0xa0] sm:$0xf]
      %v341 = vld [vmem:[%s1 + $0xa4] sm:$0xf]
      %v342 = vld [vmem:[%s1 + $0xa8] sm:$0xf]
      %v343 = vld [vmem:[%s1 + $0xac] sm:$0xf]
      %v344 = vld [vmem:[%s1 + $0xb0] sm:$0xf]
      %v345 = vld [vmem:[%s1 + $0xb4] sm:$0xf]
      %v346 = vld [vmem:[%s1 + $0xb8] sm:$0xf]
      %v347 = vld [vmem:[%s1 + $0xbc] sm:$0xf]
      %v348 = vld [vmem:[%s1 + $0xc0] sm:$0xf]
      %v349 = vld [vmem:[%s1 + $0xc4] sm:$0xf]
      %v350 = vld [vmem:[%s1 + $0xc8] sm:$0xf]
      %v351 = vld [vmem:[%s1 + $0xcc] sm:$0xf]
      %v352 = vld [vmem:[%s1 + $0xd0] sm:$0xf]
      %v353 = vld [vmem:[%s1 + $0xd4] sm:$0xf]
      %v354 = vld [vmem:[%s1 + $0xd8] sm:$0xf]
      %v355 = vld [vmem:[%s1 + $0xdc] sm:$0xf]
      %v356 = vld [vmem:[%s1 + $0xe0] sm:$0xf]
      %v357 = vld [vmem:[%s1 + $0xe4] sm:$0xf]
      %v358 = vld [vmem:[%s1 + $0xe8] sm:$0xf]
      %v359 = vld [vmem:[%s1 + $0xec] sm:$0xf]
      %v360 = vld [vmem:[%s1 + $0xf0] sm:$0xf]
      %v361 = vld [vmem:[%s1 + $0xf4] sm:$0xf]
      %v362 = vld [vmem:[%s1 + $0xf8] sm:$0xf]
      %v363 = vld [vmem:[%s1 + $0xfc] sm:$0xf]
      %v428 = vunpack.c.l.b16 %v300
      %v429 = vunpack.c.l.b16 %v301
      %v430 = vunpack.c.l.b16 %v302
      %v431 = vunpack.c.l.b16 %v303
      %v432 = vunpack.c.l.b16 %v304
      %v433 = vunpack.c.l.b16 %v305
      %v434 = vunpack.c.l.b16 %v306
      %v435 = vunpack.c.l.b16 %v307
      %v436 = vunpack.c.l.b16 %v308
      %v437 = vunpack.c.l.b16 %v309
      %v438 = vunpack.c.l.b16 %v310
      %v439 = vunpack.c.l.b16 %v311
      %v440 = vunpack.c.l.b16 %v312
      %v441 = vunpack.c.l.b16 %v313
      %v442 = vunpack.c.l.b16 %v314
      %v443 = vunpack.c.l.b16 %v315
      %v444 = vunpack.c.l.b16 %v316
      %v445 = vunpack.c.l.b16 %v317
      %v446 = vunpack.c.l.b16 %v318
      %v447 = vunpack.c.l.b16 %v319
      %v448 = vunpack.c.l.b16 %v320
      %v449 = vunpack.c.l.b16 %v321
      %v450 = vunpack.c.l.b16 %v322
      %v451 = vunpack.c.l.b16 %v323
      %v452 = vunpack.c.l.b16 %v324
      %v453 = vunpack.c.l.b16 %v325
      %v454 = vunpack.c.l.b16 %v326
      %v455 = vunpack.c.l.b16 %v327
      %v456 = vunpack.c.l.b16 %v328
      %v457 = vunpack.c.l.b16 %v329
      %v458 = vunpack.c.l.b16 %v330
      %v459 = vunpack.c.l.b16 %v331
      %v460 = vunpack.c.l.b16 %v332
      %v461 = vunpack.c.l.b16 %v333
      %v462 = vunpack.c.l.b16 %v334
      %v463 = vunpack.c.l.b16 %v335
      %v464 = vunpack.c.l.b16 %v336
      %v465 = vunpack.c.l.b16 %v337
      %v466 = vunpack.c.l.b16 %v338
      %v467 = vunpack.c.l.b16 %v339
      %v468 = vunpack.c.l.b16 %v340
      %v469 = vunpack.c.l.b16 %v341
      %v470 = vunpack.c.l.b16 %v342
      %v471 = vunpack.c.l.b16 %v343
      %v472 = vunpack.c.l.b16 %v344
      %v473 = vunpack.c.l.b16 %v345
      %v474 = vunpack.c.l.b16 %v346
      %v475 = vunpack.c.l.b16 %v347
      %v476 = vunpack.c.l.b16 %v348
      %v477 = vunpack.c.l.b16 %v349
      %v478 = vunpack.c.l.b16 %v350
      %v479 = vunpack.c.l.b16 %v351
      %v480 = vunpack.c.l.b16 %v352
      %v481 = vunpack.c.l.b16 %v353
      %v482 = vunpack.c.l.b16 %v354
      %v483 = vunpack.c.l.b16 %v355
      %v484 = vunpack.c.l.b16 %v356
      %v485 = vunpack.c.l.b16 %v357
      %v486 = vunpack.c.l.b16 %v358
      %v487 = vunpack.c.l.b16 %v359
      %v488 = vunpack.c.l.b16 %v360
      %v489 = vunpack.c.l.b16 %v361
      %v490 = vunpack.c.l.b16 %v362
      %v491 = vunpack.c.l.b16 %v363
      %v492 = vpack.c.b16 %v429, %v428
      %v493 = vpack.c.b16 %v431, %v430
      %v494 = vpack.c.b16 %v433, %v432
      %v495 = vpack.c.b16 %v435, %v434
      %v496 = vpack.c.b16 %v437, %v436
      %v497 = vpack.c.b16 %v439, %v438
      %v498 = vpack.c.b16 %v441, %v440
      %v499 = vpack.c.b16 %v443, %v442
      %v500 = vpack.c.b16 %v445, %v444
      %v501 = vpack.c.b16 %v447, %v446
      %v502 = vpack.c.b16 %v449, %v448
      %v503 = vpack.c.b16 %v451, %v450
      %v504 = vpack.c.b16 %v453, %v452
      %v505 = vpack.c.b16 %v455, %v454
      %v506 = vpack.c.b16 %v457, %v456
      %v507 = vpack.c.b16 %v459, %v458
      %v508 = vpack.c.b16 %v461, %v460
      %v509 = vpack.c.b16 %v463, %v462
      %v510 = vpack.c.b16 %v465, %v464
      %v511 = vpack.c.b16 %v467, %v466
      %v512 = vpack.c.b16 %v469, %v468
      %v513 = vpack.c.b16 %v471, %v470
      %v514 = vpack.c.b16 %v473, %v472
      %v515 = vpack.c.b16 %v475, %v474
      %v516 = vpack.c.b16 %v477, %v476
      %v517 = vpack.c.b16 %v479, %v478
      %v518 = vpack.c.b16 %v481, %v480
      %v519 = vpack.c.b16 %v483, %v482
      %v520 = vpack.c.b16 %v485, %v484
      %v521 = vpack.c.b16 %v487, %v486
      %v522 = vpack.c.b16 %v489, %v488
      %v523 = vpack.c.b16 %v491, %v490
      %556 = vmatprep.subr.bf16.mxu0 0
      %557 = vmatpush1.bf16.msra.mxu0 %v492
      %558 = vmatprep.subr.bf16.mxu0 0
      %559 = vmatpush1.bf16.msra.mxu0 %v493
      %560 = vmatprep.subr.bf16.mxu0 0
      %561 = vmatpush1.bf16.msra.mxu0 %v494
      %562 = vmatprep.subr.bf16.mxu0 0
      %563 = vmatpush1.bf16.msra.mxu0 %v495
      %564 = vmatprep.subr.bf16.mxu0 0
      %565 = vmatpush1.bf16.msra.mxu0 %v496
      %566 = vmatprep.subr.bf16.mxu0 0
      %567 = vmatpush1.bf16.msra.mxu0 %v497
      %568 = vmatprep.subr.bf16.mxu0 0
      %569 = vmatpush1.bf16.msra.mxu0 %v498
      %570 = vmatprep.subr.bf16.mxu0 0
      %571 = vmatpush1.bf16.msra.mxu0 %v499
      %572 = vmatprep.subr.bf16.mxu0 0
      %573 = vmatpush1.bf16.msra.mxu0 %v500
      %574 = vmatprep.subr.bf16.mxu0 0
      %575 = vmatpush1.bf16.msra.mxu0 %v501
      %576 = vmatprep.subr.bf16.mxu0 0
      %577 = vmatpush1.bf16.msra.mxu0 %v502
      %578 = vmatprep.subr.bf16.mxu0 0
      %579 = vmatpush1.bf16.msra.mxu0 %v503
      %580 = vmatprep.subr.bf16.mxu0 0
      %581 = vmatpush1.bf16.msra.mxu0 %v504
      %582 = vmatprep.subr.bf16.mxu0 0
      %583 = vmatpush1.bf16.msra.mxu0 %v505
      %584 = vmatprep.subr.bf16.mxu0 0
      %585 = vmatpush1.bf16.msra.mxu0 %v506
      %586 = vmatprep.subr.bf16.mxu0 0
      %587 = vmatpush1.bf16.msra.mxu0 %v507
      %588 = vmatprep.mubr.bf16.mxu0 %v297
      %589 = vmatmul.mubr.bf16.gmra.mrb[0].mxu0 %v296
      %v590 = vpop.f32.mrb[0].mxu0
      %v591 = vadd.f32 0.0, %v590
      %v592 = vpop.f32.mrb[0].mxu0
      %v593 = vpop.f32.mrb[0].mxu0
      %v594 = vadd.f32 0.0, %v593
      %v595 = vpop.f32.mrb[0].mxu0
      %596 = vdwg.mxu0
      %597 = vmatprep.subr.bf16.mxu0 0
      %598 = vmatpush1.bf16.msra.mxu0 %v508
      %599 = vmatprep.subr.bf16.mxu0 0
      %600 = vmatpush1.bf16.msra.mxu0 %v509
      %601 = vmatprep.subr.bf16.mxu0 0
      %602 = vmatpush1.bf16.msra.mxu0 %v510
      %603 = vmatprep.subr.bf16.mxu0 0
      %604 = vmatpush1.bf16.msra.mxu0 %v511
      %605 = vmatprep.subr.bf16.mxu0 0
      %606 = vmatpush1.bf16.msra.mxu0 %v512
      %607 = vmatprep.subr.bf16.mxu0 0
      %608 = vmatpush1.bf16.msra.mxu0 %v513
      %609 = vmatprep.subr.bf16.mxu0 0
      %610 = vmatpush1.bf16.msra.mxu0 %v514
      %611 = vmatprep.subr.bf16.mxu0 0
      %612 = vmatpush1.bf16.msra.mxu0 %v515
      %613 = vmatprep.subr.bf16.mxu0 0
      %614 = vmatpush1.bf16.msra.mxu0 %v516
      %615 = vmatprep.subr.bf16.mxu0 0
      %616 = vmatpush1.bf16.msra.mxu0 %v517
      %617 = vmatprep.subr.bf16.mxu0 0
      %618 = vmatpush1.bf16.msra.mxu0 %v518
      %619 = vmatprep.subr.bf16.mxu0 0
      %620 = vmatpush1.bf16.msra.mxu0 %v519
      %621 = vmatprep.subr.bf16.mxu0 0
      %622 = vmatpush1.bf16.msra.mxu0 %v520
      %623 = vmatprep.subr.bf16.mxu0 0
      %624 = vmatpush1.bf16.msra.mxu0 %v521
      %625 = vmatprep.subr.bf16.mxu0 0
      %626 = vmatpush1.bf16.msra.mxu0 %v522
      %627 = vmatprep.subr.bf16.mxu0 0
      %628 = vmatpush1.bf16.msra.mxu0 %v523
      %629 = vmatprep.mubr.bf16.mxu0 %v299
      %630 = vmatmul.mubr.bf16.gmra.mrb[0].mxu0 %v298
      %v631 = vpop.f32.mrb[0].mxu0
      %v632 = vadd.f32 %v591, %v631
      %v633 = vpop.f32.mrb[0].mxu0
      %v634 = vpop.f32.mrb[0].mxu0
      %v635 = vadd.f32 %v594, %v634
      %v636 = vpop.f32.mrb[0].mxu0
      %637 = vdwg.mxu0
      %v638 = vpack.c.bf16 %v635, %v632
      %vm639 = vcmask 261120
      %640 = vst.msk [vmem:[#allocation3 + $0x8] sm:$0xff] %vm639, %v638
      %v641 = vld [vmem:[#allocation3] sm:$0xff]
      %v642 = vld [vmem:[#allocation3 + $0x8] sm:$0xff]
      %v643 = vld [vmem:[%s6] sm:$0x1]
      %v645 = vpack.i.b16 %v643, %v643
      %v647 = vlaneseq
      %v648 = vshrl.u32 %v647, 7
      %v649 = vsub.s32 0, %v648
      %v650 = vrot.slane %v645, %v649
      %652 = vrot.lane.b32.xlu0 %v650, 123
      %v653 = vpop.permute.xlu0 %652
      %v655 = vmul.bf16 %v641, %v653
      %v656 = vmul.bf16 %v642, %v653
      %v657 = vshrl.u32 %v643, 16
      %v658 = vpack.i.b16 %v657, %v657
      %v660 = vlaneseq
      %v661 = vshrl.u32 %v660, 7
      %v662 = vsub.s32 0, %v661
      %v663 = vrot.slane %v658, %v662
      %665 = vrot.lane.b32.xlu0 %v663, 124
      %v666 = vpop.permute.xlu0 %665
      %v668 = vmul.bf16 %v641, %v666
      %v669 = vmul.bf16 %v642, %v666
      %v670 = vld [vmem:[%s6] sm:$0x2]
      %v672 = vpack.i.b16 %v670, %v670
      %v674 = vlaneseq
      %v675 = vshrl.u32 %v674, 7
      %v676 = vsub.s32 1, %v675
      %v677 = vrot.slane %v672, %v676
      %679 = vrot.lane.b32.xlu0 %v677, 125
      %v680 = vpop.permute.xlu0 %679
      %v682 = vmul.bf16 %v641, %v680
      %v683 = vmul.bf16 %v642, %v680
      %v684 = vshrl.u32 %v670, 16
      %v685 = vpack.i.b16 %v684, %v684
      %v687 = vlaneseq
      %v688 = vshrl.u32 %v687, 7
      %v689 = vsub.s32 1, %v688
      %v690 = vrot.slane %v685, %v689
      %692 = vrot.lane.b32.xlu0 %v690, 127
      %v693 = vpop.permute.xlu0 %692
      %v695 = vmul.bf16 %v641, %v693
      %v696 = vmul.bf16 %v642, %v693
      %v697 = vld [vmem:[%s6] sm:$0x4]
      %v699 = vshrl.u32 %v697, 16
      %v700 = vpack.i.b16 %v699, %v699
      %v702 = vlaneseq
      %v703 = vshrl.u32 %v702, 7
      %v704 = vsub.s32 2, %v703
      %v705 = vrot.slane %v700, %v704
      %707 = vrot.lane.b32.xlu0 %v705, 1
      %v708 = vpop.permute.xlu0 %707
      %v710 = vmul.bf16 %v642, %v708
      %v711 = vld [vmem:[%s6] sm:$0x8]
      %v713 = vpack.i.b16 %v711, %v711
      %v715 = vlaneseq
      %v716 = vshrl.u32 %v715, 7
      %v717 = vsub.s32 3, %v716
      %v718 = vrot.slane %v713, %v717
      %720 = vrot.lane.b32.xlu0 %v718, 3
      %v721 = vpop.permute.xlu0 %720
      %v723 = vmul.bf16 %v642, %v721
      %v724 = vshrl.u32 %v711, 16
      %v725 = vpack.i.b16 %v724, %v724
      %v727 = vlaneseq
      %v728 = vshrl.u32 %v727, 7
      %v729 = vsub.s32 3, %v728
      %v730 = vrot.slane %v725, %v729
      %732 = vrot.lane.b32.xlu0 %v730, 4
      %v733 = vpop.permute.xlu0 %732
      %v735 = vmul.bf16 %v642, %v733
      %v736 = vld [vmem:[%s6 + $0x4] sm:$0x1]
      %v738 = vpack.i.b16 %v736, %v736
      %v740 = vlaneseq
      %v741 = vshrl.u32 %v740, 7
      %v742 = vsub.s32 0, %v741
      %v743 = vrot.slane %v738, %v742
      %745 = vrot.lane.b32.xlu0 %v743, 5
      %v746 = vpop.permute.xlu0 %745
      %v748 = vmul.bf16 %v642, %v746
      %751 = vrot.lane.b32.xlu0 %v668, 127
      %v752 = vpop.permute.xlu0 %751
      %753 = vrot.lane.b32.xlu0 %v669, 127
      %v754 = vpop.permute.xlu0 %753
      %vm755 = vcmask 1039360
      %v756 = vsel %vm755, %v752, %v754
      %759 = vrot.lane.b32.xlu0 %v682, 126
      %v760 = vpop.permute.xlu0 %759
      %761 = vrot.lane.b32.xlu0 %v683, 126
      %v762 = vpop.permute.xlu0 %761
      %vm763 = vcmask 1031168
      %v764 = vsel %vm763, %v760, %v762
      %767 = vrot.lane.b32.xlu0 %v695, 124
      %v768 = vpop.permute.xlu0 %767
      %769 = vrot.lane.b32.xlu0 %v696, 124
      %v770 = vpop.permute.xlu0 %769
      %vm771 = vcmask 1014784
      %v772 = vsel %vm771, %v768, %v770
      %774 = vrot.lane.b32.xlu0 %v642, 123
      %v775 = vpop.permute.xlu0 %774
      %777 = vrot.lane.b32.xlu0 %v710, 122
      %v778 = vpop.permute.xlu0 %777
      %780 = vrot.lane.b32.xlu0 %v723, 120
      %v781 = vpop.permute.xlu0 %780
      %783 = vrot.lane.b32.xlu0 %v735, 119
      %v784 = vpop.permute.xlu0 %783
      %786 = vrot.lane.b32.xlu0 %v748, 118
      %v787 = vpop.permute.xlu0 %786
      %v788 = vld [vmem:[%s3] sm:$0xff]
      %v789 = vld [vmem:[%s3 + $0x8] sm:$0xff]
      %v790 = vld [vmem:[%s4] sm:$0xff]
      %v791 = vld [vmem:[%s4 + $0x8] sm:$0xff]
      %793 = vset.pattern.permute.xlu0 0
      %794 = vperm.xlu0 %793, %v790
      %v795 = vpop.permute.xlu0 %794
      %798 = vset.pattern.permute.xlu0 0
      %799 = vperm.xlu0 %798, %v791
      %v800 = vpop.permute.xlu0 %799
      %v804 = vunpack.c.l.b16 %v788
      %v805 = vunpack.c.h.b16 %v788
      %v806 = vunpack.c.l.b16 %v789
      %v807 = vunpack.c.h.b16 %v789
      %v808 = vpack.c.b16 %v806, %v804
      %v809 = vpack.c.b16 %v807, %v805
      %813 = vrot.lane.b32.xlu0 %v655, 5
      %v814 = vpop.permute.xlu0 %813
      %815 = vrot.lane.b32.xlu0 %v656, 5
      %v816 = vpop.permute.xlu0 %815
      %817 = vrot.lane.b32.xlu0 %v756, 5
      %v818 = vpop.permute.xlu0 %817
      %819 = vrot.lane.b32.xlu0 %v754, 5
      %v820 = vpop.permute.xlu0 %819
      %821 = vrot.lane.b32.xlu0 %v764, 5
      %v822 = vpop.permute.xlu0 %821
      %823 = vrot.lane.b32.xlu0 %v762, 5
      %v824 = vpop.permute.xlu0 %823
      %825 = vrot.lane.b32.xlu0 %v772, 5
      %v826 = vpop.permute.xlu0 %825
      %827 = vrot.lane.b32.xlu0 %v770, 5
      %v828 = vpop.permute.xlu0 %827
      %829 = vrot.lane.b32.xlu0 %v775, 5
      %v830 = vpop.permute.xlu0 %829
      %831 = vrot.lane.b32.xlu0 %v778, 5
      %v832 = vpop.permute.xlu0 %831
      %833 = vrot.lane.b32.xlu0 %v781, 5
      %v834 = vpop.permute.xlu0 %833
      %835 = vrot.lane.b32.xlu0 %v784, 5
      %v836 = vpop.permute.xlu0 %835
      %837 = vrot.lane.b32.xlu0 %v787, 5
      %v838 = vpop.permute.xlu0 %837
      %vm839 = vcmask 39936
      %v840 = vsel %vm839, %v814, %v816
      %v841 = vsel %vm839, %v818, %v820
      %v842 = vsel %vm839, %v822, %v824
      %v843 = vsel %vm839, %v826, %v828
      %vm853 = vcmask 130048
      %v855 = vsel %vm853, %v809, 0
      %857 = vmatprep.subr.bf16.mxu0 0
      %858 = vmatpush1.bf16.msra.mxu0 %v840
      %859 = vmatprep.subr.bf16.mxu0 0
      %860 = vmatpush1.bf16.msra.mxu0 %v841
      %861 = vmatprep.subr.bf16.mxu0 0
      %862 = vmatpush1.bf16.msra.mxu0 %v842
      %863 = vmatprep.subr.bf16.mxu0 0
      %864 = vmatpush1.bf16.msra.mxu0 %v843
      %865 = vmatprep.subr.bf16.mxu0 0
      %866 = vmatpush1.bf16.msra.mxu0 %v830
      %867 = vmatprep.subr.bf16.mxu0 0
      %868 = vmatpush1.bf16.msra.mxu0 %v832
      %869 = vmatprep.subr.bf16.mxu0 0
      %870 = vmatpush1.bf16.msra.mxu0 %v834
      %871 = vmatprep.subr.bf16.mxu0 0
      %872 = vmatpush1.bf16.msra.mxu0 %v836
      %873 = vmatprep.subr.bf16.mxu0 0
      %874 = vmatpush1.bf16.msra.mxu0 %v838
      %875 = vmatprep.subr.bf16.mxu0 0
      %876 = vmatpush1.bf16.msra.mxu0 0
      %877 = vmatprep.subr.bf16.mxu0 0
      %878 = vmatpush1.bf16.msra.mxu0 0
      %879 = vmatprep.subr.bf16.mxu0 0
      %880 = vmatpush1.bf16.msra.mxu0 0
      %881 = vmatprep.subr.bf16.mxu0 0
      %882 = vmatpush1.bf16.msra.mxu0 0
      %883 = vmatprep.subr.bf16.mxu0 0
      %884 = vmatpush1.bf16.msra.mxu0 0
      %885 = vmatprep.subr.bf16.mxu0 0
      %886 = vmatpush1.bf16.msra.mxu0 0
      %887 = vmatprep.subr.bf16.mxu0 0
      %888 = vmatpush1.bf16.msra.mxu0 0
      %889 = vmatprep.mubr.bf16.mxu0 %v855
      %890 = vmatmul.mubr.bf16.gmra.mrb[0].mxu0 %v808
      %v891 = vpop.f32.mrb[0].mxu0
      %v892 = vadd.f32 %v795, %v891
      %v893 = vpop.f32.mrb[0].mxu0
      %v894 = vpop.f32.mrb[0].mxu0
      %v895 = vadd.f32 %v800, %v894
      %v896 = vpop.f32.mrb[0].mxu0
      %897 = vdwg.mxu0
      %v898 = vpack.c.bf16 %v895, %v892
      %v899 = vld [vmem:[%s2] sm:$0xff]
      %v900 = vld [vmem:[%s2 + $0x8] sm:$0xff]
      %v901 = vld [vmem:[%s2 + $0x10] sm:$0xff]
      %v902 = vld [vmem:[%s2 + $0x18] sm:$0xff]
      %v903 = vld [vmem:[%s2 + $0x20] sm:$0xff]
      %v904 = vld [vmem:[%s2 + $0x28] sm:$0xff]
      %v905 = vld [vmem:[%s2 + $0x30] sm:$0xff]
      %v906 = vld [vmem:[%s2 + $0x38] sm:$0xff]
      %v915 = vunpack.c.l.b16 %v899
      %v916 = vunpack.c.h.b16 %v899
      %v917 = vunpack.c.l.b16 %v900
      %v918 = vunpack.c.h.b16 %v900
      %v919 = vunpack.c.l.b16 %v901
      %v920 = vunpack.c.h.b16 %v901
      %v921 = vunpack.c.l.b16 %v902
      %v922 = vunpack.c.h.b16 %v902
      %v923 = vunpack.c.l.b16 %v903
      %v924 = vunpack.c.h.b16 %v903
      %v925 = vunpack.c.l.b16 %v904
      %v926 = vunpack.c.h.b16 %v904
      %v927 = vunpack.c.l.b16 %v905
      %v928 = vunpack.c.h.b16 %v905
      %v929 = vunpack.c.l.b16 %v906
      %v930 = vunpack.c.h.b16 %v906
      %v931 = vpack.c.b16 %v919, %v915
      %v932 = vpack.c.b16 %v920, %v916
      %v933 = vpack.c.b16 %v921, %v917
      %v934 = vpack.c.b16 %v922, %v918
      %v935 = vpack.c.b16 %v927, %v923
      %v936 = vpack.c.b16 %v928, %v924
      %v937 = vpack.c.b16 %v929, %v925
      %v938 = vpack.c.b16 %v930, %v926
      %v948 = vsel %vm639, %v898, 0
      %950 = vmatprep.subr.bf16.mxu0 %v932
      %951 = vmatpush1.bf16.msra.mxu0 %v931
      %952 = vmatprep.subr.bf16.mxu0 %v936
      %953 = vmatpush1.bf16.msra.mxu0 %v935
      %954 = vmatprep.subr.bf16.mxu0 0
      %955 = vmatpush1.bf16.msra.mxu0 0
      %956 = vmatprep.subr.bf16.mxu0 0
      %957 = vmatpush1.bf16.msra.mxu0 0
      %958 = vmatprep.subr.bf16.mxu0 0
      %959 = vmatpush1.bf16.msra.mxu0 0
      %960 = vmatprep.subr.bf16.mxu0 0
      %961 = vmatpush1.bf16.msra.mxu0 0
      %962 = vmatprep.subr.bf16.mxu0 0
      %963 = vmatpush1.bf16.msra.mxu0 0
      %964 = vmatprep.subr.bf16.mxu0 0
      %965 = vmatpush1.bf16.msra.mxu0 0
      %966 = vmatprep.subr.bf16.mxu0 0
      %967 = vmatpush1.bf16.msra.mxu0 0
      %968 = vmatprep.subr.bf16.mxu0 0
      %969 = vmatpush1.bf16.msra.mxu0 0
      %970 = vmatprep.subr.bf16.mxu0 0
      %971 = vmatpush1.bf16.msra.mxu0 0
      %972 = vmatprep.subr.bf16.mxu0 0
      %973 = vmatpush1.bf16.msra.mxu0 0
      %974 = vmatprep.subr.bf16.mxu0 0
      %975 = vmatpush1.bf16.msra.mxu0 0
      %976 = vmatprep.subr.bf16.mxu0 0
      %977 = vmatpush1.bf16.msra.mxu0 0
      %978 = vmatprep.subr.bf16.mxu0 0
      %979 = vmatpush1.bf16.msra.mxu0 0
      %980 = vmatprep.subr.bf16.mxu0 0
      %981 = vmatpush1.bf16.msra.mxu0 0
      %982 = vmatprep.mubr.bf16.mxu0 0
      %983 = vmatmul.mubr.bf16.gmra.mrb[0].mxu0 %v948
      %v984 = vpop.f32.mrb[0].mxu0
      %v985 = vadd.f32 0.0, %v984
      %v986 = vpop.f32.mrb[0].mxu0
      %v987 = vadd.f32 0.0, %v986
      %v988 = vpop.f32.mrb[0].mxu0
      %v989 = vadd.f32 0.0, %v988
      %v990 = vpop.f32.mrb[0].mxu0
      %v991 = vadd.f32 0.0, %v990
      %992 = vdwg.mxu0
      %993 = vmatprep.subr.bf16.mxu0 %v934
      %994 = vmatpush1.bf16.msra.mxu0 %v933
      %995 = vmatprep.subr.bf16.mxu0 %v938
      %996 = vmatpush1.bf16.msra.mxu0 %v937
      %997 = vmatprep.subr.bf16.mxu0 0
      %998 = vmatpush1.bf16.msra.mxu0 0
      %999 = vmatprep.subr.bf16.mxu0 0
      %1000 = vmatpush1.bf16.msra.mxu0 0
      %1001 = vmatprep.subr.bf16.mxu0 0
      %1002 = vmatpush1.bf16.msra.mxu0 0
      %1003 = vmatprep.subr.bf16.mxu0 0
      %1004 = vmatpush1.bf16.msra.mxu0 0
      %1005 = vmatprep.subr.bf16.mxu0 0
      %1006 = vmatpush1.bf16.msra.mxu0 0
      %1007 = vmatprep.subr.bf16.mxu0 0
      %1008 = vmatpush1.bf16.msra.mxu0 0
      %1009 = vmatprep.subr.bf16.mxu0 0
      %1010 = vmatpush1.bf16.msra.mxu0 0
      %1011 = vmatprep.subr.bf16.mxu0 0
      %1012 = vmatpush1.bf16.msra.mxu0 0
      %1013 = vmatprep.subr.bf16.mxu0 0
      %1014 = vmatpush1.bf16.msra.mxu0 0
      %1015 = vmatprep.subr.bf16.mxu0 0
      %1016 = vmatpush1.bf16.msra.mxu0 0
      %1017 = vmatprep.subr.bf16.mxu0 0
      %1018 = vmatpush1.bf16.msra.mxu0 0
      %1019 = vmatprep.subr.bf16.mxu0 0
      %1020 = vmatpush1.bf16.msra.mxu0 0
      %1021 = vmatprep.subr.bf16.mxu0 0
      %1022 = vmatpush1.bf16.msra.mxu0 0
      %1023 = vmatprep.subr.bf16.mxu0 0
      %1024 = vmatpush1.bf16.msra.mxu0 0
      %1025 = vmatprep.mubr.bf16.mxu0 0
      %1026 = vmatmul.mubr.bf16.gmra.mrb[0].mxu0 %v948
      %v1027 = vpop.f32.mrb[0].mxu0
      %v1028 = vadd.f32 0.0, %v1027
      %v1029 = vpop.f32.mrb[0].mxu0
      %v1030 = vadd.f32 0.0, %v1029
      %v1031 = vpop.f32.mrb[0].mxu0
      %v1032 = vadd.f32 0.0, %v1031
      %v1033 = vpop.f32.mrb[0].mxu0
      %v1034 = vadd.f32 0.0, %v1033
      %1035 = vdwg.mxu0
      %v1036 = vadd.f32 %v288, %v985
      %v1037 = vadd.f32 %v289, %v987
      %v1038 = vadd.f32 %v290, %v1028
      %v1039 = vadd.f32 %v291, %v1030
      %v1040 = vadd.f32 %v292, %v989
      %v1041 = vadd.f32 %v293, %v991
      %v1042 = vadd.f32 %v294, %v1032
      %v1043 = vadd.f32 %v295, %v1034
      %v1044 = vand.u32 2147483647, %v1036
      %v1045 = vand.u32 2147483647, %v1037
      %v1046 = vand.u32 2147483647, %v1038
      %v1047 = vand.u32 2147483647, %v1039
      %v1048 = vand.u32 2147483647, %v1040
      %v1049 = vand.u32 2147483647, %v1041
      %v1050 = vand.u32 2147483647, %v1042
      %v1051 = vand.u32 2147483647, %v1043
      %v1052 = vsub.f32 0.0, %v1044
      %v1053 = vsub.f32 0.0, %v1045
      %v1054 = vsub.f32 0.0, %v1046
      %v1055 = vsub.f32 0.0, %v1047
      %v1056 = vsub.f32 0.0, %v1048
      %v1057 = vsub.f32 0.0, %v1049
      %v1058 = vsub.f32 0.0, %v1050
      %v1059 = vsub.f32 0.0, %v1051
      %v1060 = vmul.f32 %v1052, 1.442695
      %v1061 = vpow.pop %v1060
      %v1062 = vmul.f32 %v1053, 1.442695
      %v1063 = vpow.pop %v1062
      %v1064 = vmul.f32 %v1054, 1.442695
      %v1065 = vpow.pop %v1064
      %v1066 = vmul.f32 %v1055, 1.442695
      %v1067 = vpow.pop %v1066
      %v1068 = vmul.f32 %v1056, 1.442695
      %v1069 = vpow.pop %v1068
      %v1070 = vmul.f32 %v1057, 1.442695
      %v1071 = vpow.pop %v1070
      %v1072 = vmul.f32 %v1058, 1.442695
      %v1073 = vpow.pop %v1072
      %v1074 = vmul.f32 %v1059, 1.442695
      %v1075 = vpow.pop %v1074
      %v1076 = vadd.f32 %v1061, 1.0
      %v1077 = vadd.f32 %v1063, 1.0
      %v1078 = vadd.f32 %v1065, 1.0
      %v1079 = vadd.f32 %v1067, 1.0
      %v1080 = vadd.f32 %v1069, 1.0
      %v1081 = vadd.f32 %v1071, 1.0
      %v1082 = vadd.f32 %v1073, 1.0
      %v1083 = vadd.f32 %v1075, 1.0
      %v1084 = vrcp.pop %v1076
      %v1085 = vrcp.pop %v1077
      %v1086 = vrcp.pop %v1078
      %v1087 = vrcp.pop %v1079
      %v1088 = vrcp.pop %v1080
      %v1089 = vrcp.pop %v1081
      %v1090 = vrcp.pop %v1082
      %v1091 = vrcp.pop %v1083
      %vm1092 = vcmp.ge.f32.partialorder %v1036, 0.0
      %vm1093 = vcmp.ge.f32.partialorder %v1037, 0.0
      %vm1094 = vcmp.ge.f32.partialorder %v1038, 0.0
      %vm1095 = vcmp.ge.f32.partialorder %v1039, 0.0
      %vm1096 = vcmp.ge.f32.partialorder %v1040, 0.0
      %vm1097 = vcmp.ge.f32.partialorder %v1041, 0.0
      %vm1098 = vcmp.ge.f32.partialorder %v1042, 0.0
      %vm1099 = vcmp.ge.f32.partialorder %v1043, 0.0
      %v1100 = vmul.f32 %v1061, %v1084
      %v1101 = vmul.f32 %v1063, %v1085
      %v1102 = vmul.f32 %v1065, %v1086
      %v1103 = vmul.f32 %v1067, %v1087
      %v1104 = vmul.f32 %v1069, %v1088
      %v1105 = vmul.f32 %v1071, %v1089
      %v1106 = vmul.f32 %v1073, %v1090
      %v1107 = vmul.f32 %v1075, %v1091
      %v1108 = vsel %vm1092, %v1084, %v1100
      %v1109 = vsel %vm1093, %v1085, %v1101
      %v1110 = vsel %vm1094, %v1086, %v1102
      %v1111 = vsel %vm1095, %v1087, %v1103
      %v1112 = vsel %vm1096, %v1088, %v1104
      %v1113 = vsel %vm1097, %v1089, %v1105
      %v1114 = vsel %vm1098, %v1090, %v1106
      %v1115 = vsel %vm1099, %v1091, %v1107
      %1116 = vst [vmem:[#allocation2 + $0x8] sm:$0xff] %v296
      %1117 = vst [vmem:[#allocation2 + $0x10] sm:$0xff] %v297
      %1118 = vst [vmem:[#allocation2 + $0x18] sm:$0xff] %v298
      %1119 = vst [vmem:[#allocation2 + $0x20] sm:$0xff] %v299
      %v1120 = vld [vmem:[#allocation2] sm:$0xff]
      %v1121 = vld [vmem:[#allocation2 + $0x8] sm:$0xff]
      %v1122 = vld [vmem:[#allocation2 + $0x10] sm:$0xff]
      %v1123 = vld [vmem:[#allocation2 + $0x18] sm:$0xff]
      %v1124 = vld [vmem:[#allocation2 + $0x20] sm:$0xff]
      %v1125 = vld [vmem:[%s5] sm:$0x11]
      %v1126 = vld [vmem:[%s5 + $0x8] sm:$0x11]
      %v1129 = vunpack.c.l.b16 %v1125
      %v1130 = vunpack.c.h.b16 %v1125
      %v1131 = vunpack.c.l.b16 %v1126
      %v1132 = vunpack.c.h.b16 %v1126
      %v1133 = vpack.c.b16 %v1129, %v1129
      %v1134 = vpack.c.b16 %v1130, %v1130
      %v1135 = vpack.c.b16 %v1131, %v1131
      %v1136 = vpack.c.b16 %v1132, %v1132
      %v1138 = vpack.i.b16 %v1133, %v1133
      %v1140 = vlaneseq
      %v1141 = vshrl.u32 %v1140, 7
      %v1142 = vsub.s32 0, %v1141
      %v1143 = vrot.slane %v1138, %v1142
      %v1145 = vpack.i.b16 %v1134, %v1134
      %v1147 = vlaneseq
      %v1148 = vshrl.u32 %v1147, 7
      %v1149 = vsub.s32 0, %v1148
      %v1150 = vrot.slane %v1145, %v1149
      %v1152 = vpack.i.b16 %v1135, %v1135
      %v1154 = vlaneseq
      %v1155 = vshrl.u32 %v1154, 7
      %v1156 = vsub.s32 0, %v1155
      %v1157 = vrot.slane %v1152, %v1156
      %v1159 = vpack.i.b16 %v1136, %v1136
      %v1161 = vlaneseq
      %v1162 = vshrl.u32 %v1161, 7
      %v1163 = vsub.s32 0, %v1162
      %v1164 = vrot.slane %v1159, %v1163
      %1169 = vrot.lane.b32.xlu0 %v1143, 111
      %v1170 = vpop.permute.xlu0 %1169
      %1171 = vrot.lane.b32.xlu0 %v1150, 111
      %v1172 = vpop.permute.xlu0 %1171
      %1173 = vrot.lane.b32.xlu0 %v1157, 111
      %v1174 = vpop.permute.xlu0 %1173
      %1175 = vrot.lane.b32.xlu0 %v1164, 111
      %v1176 = vpop.permute.xlu0 %1175
      %vm1177 = vcmask 908288
      %v1178 = vsel %vm1177, %v1170, %v1172
      %v1179 = vsel %vm1177, %v1172, %v1174
      %v1180 = vsel %vm1177, %v1174, %v1176
      %v1186 = vmul.bf16 %v1120, %v1170
      %v1187 = vmul.bf16 %v1121, %v1178
      %v1188 = vmul.bf16 %v1122, %v1179
      %v1189 = vmul.bf16 %v1123, %v1180
      %v1190 = vmul.bf16 %v1124, %v1176
      %v1191 = vshrl.u32 %v1133, 16
      %v1192 = vpack.i.b16 %v1191, %v1191
      %v1194 = vlaneseq
      %v1195 = vshrl.u32 %v1194, 7
      %v1196 = vsub.s32 0, %v1195
      %v1197 = vrot.slane %v1192, %v1196
      %v1198 = vshrl.u32 %v1134, 16
      %v1199 = vpack.i.b16 %v1198, %v1198
      %v1201 = vlaneseq
      %v1202 = vshrl.u32 %v1201, 7
      %v1203 = vsub.s32 0, %v1202
      %v1204 = vrot.slane %v1199, %v1203
      %v1205 = vshrl.u32 %v1135, 16
      %v1206 = vpack.i.b16 %v1205, %v1205
      %v1208 = vlaneseq
      %v1209 = vshrl.u32 %v1208, 7
      %v1210 = vsub.s32 0, %v1209
      %v1211 = vrot.slane %v1206, %v1210
      %v1212 = vshrl.u32 %v1136, 16
      %v1213 = vpack.i.b16 %v1212, %v1212
      %v1215 = vlaneseq
      %v1216 = vshrl.u32 %v1215, 7
      %v1217 = vsub.s32 0, %v1216
      %v1218 = vrot.slane %v1213, %v1217
      %1223 = vrot.lane.b32.xlu0 %v1197, 112
      %v1224 = vpop.permute.xlu0 %1223
      %1225 = vrot.lane.b32.xlu0 %v1204, 112
      %v1226 = vpop.permute.xlu0 %1225
      %1227 = vrot.lane.b32.xlu0 %v1211, 112
      %v1228 = vpop.permute.xlu0 %1227
      %1229 = vrot.lane.b32.xlu0 %v1218, 112
      %v1230 = vpop.permute.xlu0 %1229
      %vm1231 = vcmask 916480
      %v1232 = vsel %vm1231, %v1224, %v1226
      %v1233 = vsel %vm1231, %v1226, %v1228
      %v1234 = vsel %vm1231, %v1228, %v1230
      %v1240 = vmul.bf16 %v1120, %v1224
      %v1241 = vmul.bf16 %v1121, %v1232
      %v1242 = vmul.bf16 %v1122, %v1233
      %v1243 = vmul.bf16 %v1123, %v1234
      %v1244 = vmul.bf16 %v1124, %v1230
      %v1245 = vld [vmem:[%s5] sm:$0x22]
      %v1246 = vld [vmem:[%s5 + $0x8] sm:$0x22]
      %v1249 = vunpack.c.l.b16 %v1245
      %v1250 = vunpack.c.h.b16 %v1245
      %v1251 = vunpack.c.l.b16 %v1246
      %v1252 = vunpack.c.h.b16 %v1246
      %v1253 = vpack.c.b16 %v1249, %v1249
      %v1254 = vpack.c.b16 %v1250, %v1250
      %v1255 = vpack.c.b16 %v1251, %v1251
      %v1256 = vpack.c.b16 %v1252, %v1252
      %v1258 = vpack.i.b16 %v1253, %v1253
      %v1260 = vlaneseq
      %v1261 = vshrl.u32 %v1260, 7
      %v1262 = vsub.s32 1, %v1261
      %v1263 = vrot.slane %v1258, %v1262
      %v1265 = vpack.i.b16 %v1254, %v1254
      %v1267 = vlaneseq
      %v1268 = vshrl.u32 %v1267, 7
      %v1269 = vsub.s32 1, %v1268
      %v1270 = vrot.slane %v1265, %v1269
      %v1272 = vpack.i.b16 %v1255, %v1255
      %v1274 = vlaneseq
      %v1275 = vshrl.u32 %v1274, 7
      %v1276 = vsub.s32 1, %v1275
      %v1277 = vrot.slane %v1272, %v1276
      %v1279 = vpack.i.b16 %v1256, %v1256
      %v1281 = vlaneseq
      %v1282 = vshrl.u32 %v1281, 7
      %v1283 = vsub.s32 1, %v1282
      %v1284 = vrot.slane %v1279, %v1283
      %1289 = vrot.lane.b32.xlu0 %v1263, 113
      %v1290 = vpop.permute.xlu0 %1289
      %1291 = vrot.lane.b32.xlu0 %v1270, 113
      %v1292 = vpop.permute.xlu0 %1291
      %1293 = vrot.lane.b32.xlu0 %v1277, 113
      %v1294 = vpop.permute.xlu0 %1293
      %1295 = vrot.lane.b32.xlu0 %v1284, 113
      %v1296 = vpop.permute.xlu0 %1295
      %vm1297 = vcmask 924672
      %v1298 = vsel %vm1297, %v1290, %v1292
      %v1299 = vsel %vm1297, %v1292, %v1294
      %v1300 = vsel %vm1297, %v1294, %v1296
      %v1306 = vmul.bf16 %v1120, %v1290
      %v1307 = vmul.bf16 %v1121, %v1298
      %v1308 = vmul.bf16 %v1122, %v1299
      %v1309 = vmul.bf16 %v1123, %v1300
      %v1310 = vmul.bf16 %v1124, %v1296
      %v1311 = vshrl.u32 %v1253, 16
      %v1312 = vpack.i.b16 %v1311, %v1311
      %v1314 = vlaneseq
      %v1315 = vshrl.u32 %v1314, 7
      %v1316 = vsub.s32 1, %v1315
      %v1317 = vrot.slane %v1312, %v1316
      %v1318 = vshrl.u32 %v1254, 16
      %v1319 = vpack.i.b16 %v1318, %v1318
      %v1321 = vlaneseq
      %v1322 = vshrl.u32 %v1321, 7
      %v1323 = vsub.s32 1, %v1322
      %v1324 = vrot.slane %v1319, %v1323
      %v1325 = vshrl.u32 %v1255, 16
      %v1326 = vpack.i.b16 %v1325, %v1325
      %v1328 = vlaneseq
      %v1329 = vshrl.u32 %v1328, 7
      %v1330 = vsub.s32 1, %v1329
      %v1331 = vrot.slane %v1326, %v1330
      %v1332 = vshrl.u32 %v1256, 16
      %v1333 = vpack.i.b16 %v1332, %v1332
      %v1335 = vlaneseq
      %v1336 = vshrl.u32 %v1335, 7
      %v1337 = vsub.s32 1, %v1336
      %v1338 = vrot.slane %v1333, %v1337
      %1343 = vrot.lane.b32.xlu0 %v1317, 127
      %v1344 = vpop.permute.xlu0 %1343
      %1345 = vrot.lane.b32.xlu0 %v1324, 127
      %v1346 = vpop.permute.xlu0 %1345
      %1347 = vrot.lane.b32.xlu0 %v1331, 127
      %v1348 = vpop.permute.xlu0 %1347
      %1349 = vrot.lane.b32.xlu0 %v1338, 127
      %v1350 = vpop.permute.xlu0 %1349
      %v1351 = vsel %vm755, %v1344, %v1346
      %v1352 = vsel %vm755, %v1346, %v1348
      %v1353 = vsel %vm755, %v1348, %v1350
      %v1359 = vmul.bf16 %v1120, %v1344
      %v1360 = vmul.bf16 %v1121, %v1351
      %v1361 = vmul.bf16 %v1122, %v1352
      %v1362 = vmul.bf16 %v1123, %v1353
      %v1363 = vmul.bf16 %v1124, %v1350
      %v1364 = vld [vmem:[#allocation2 + $0x8] sm:$0xff]
      %v1365 = vld [vmem:[#allocation2 + $0x10] sm:$0xff]
      %v1366 = vld [vmem:[#allocation2 + $0x18] sm:$0xff]
      %v1367 = vld [vmem:[#allocation2 + $0x20] sm:$0xff]
      %v1368 = vld [vmem:[#allocation2 + $0x28] sm:$0xff]
      %v1369 = vld [vmem:[%s5] sm:$0x44]
      %v1370 = vld [vmem:[%s5 + $0x8] sm:$0x44]
      %v1373 = vunpack.c.l.b16 %v1369
      %v1374 = vunpack.c.h.b16 %v1369
      %v1375 = vunpack.c.l.b16 %v1370
      %v1376 = vunpack.c.h.b16 %v1370
      %v1377 = vpack.c.b16 %v1373, %v1373
      %v1378 = vpack.c.b16 %v1374, %v1374
      %v1379 = vpack.c.b16 %v1375, %v1375
      %v1380 = vpack.c.b16 %v1376, %v1376
      %v1382 = vshrl.u32 %v1377, 16
      %v1383 = vpack.i.b16 %v1382, %v1382
      %v1385 = vlaneseq
      %v1386 = vshrl.u32 %v1385, 7
      %v1387 = vsub.s32 2, %v1386
      %v1388 = vrot.slane %v1383, %v1387
      %v1390 = vshrl.u32 %v1378, 16
      %v1391 = vpack.i.b16 %v1390, %v1390
      %v1393 = vlaneseq
      %v1394 = vshrl.u32 %v1393, 7
      %v1395 = vsub.s32 2, %v1394
      %v1396 = vrot.slane %v1391, %v1395
      %v1398 = vshrl.u32 %v1379, 16
      %v1399 = vpack.i.b16 %v1398, %v1398
      %v1401 = vlaneseq
      %v1402 = vshrl.u32 %v1401, 7
      %v1403 = vsub.s32 2, %v1402
      %v1404 = vrot.slane %v1399, %v1403
      %v1406 = vshrl.u32 %v1380, 16
      %v1407 = vpack.i.b16 %v1406, %v1406
      %v1409 = vlaneseq
      %v1410 = vshrl.u32 %v1409, 7
      %v1411 = vsub.s32 2, %v1410
      %v1412 = vrot.slane %v1407, %v1411
      %1417 = vrot.lane.b32.xlu0 %v1388, 1
      %v1418 = vpop.permute.xlu0 %1417
      %1419 = vrot.lane.b32.xlu0 %v1396, 1
      %v1420 = vpop.permute.xlu0 %1419
      %1421 = vrot.lane.b32.xlu0 %v1404, 1
      %v1422 = vpop.permute.xlu0 %1421
      %1423 = vrot.lane.b32.xlu0 %v1412, 1
      %v1424 = vpop.permute.xlu0 %1423
      %vm1425 = vcmask 7168
      %v1426 = vsel %vm1425, %v1418, %v1420
      %v1427 = vsel %vm1425, %v1420, %v1422
      %v1428 = vsel %vm1425, %v1422, %v1424
      %v1434 = vmul.bf16 %v1364, %v1418
      %v1435 = vmul.bf16 %v1365, %v1426
      %v1436 = vmul.bf16 %v1366, %v1427
      %v1437 = vmul.bf16 %v1367, %v1428
      %v1438 = vmul.bf16 %v1368, %v1424
      %v1439 = vld [vmem:[%s5] sm:$0x88]
      %v1440 = vld [vmem:[%s5 + $0x8] sm:$0x88]
      %v1443 = vunpack.c.l.b16 %v1439
      %v1444 = vunpack.c.h.b16 %v1439
      %v1445 = vunpack.c.l.b16 %v1440
      %v1446 = vunpack.c.h.b16 %v1440
      %v1447 = vpack.c.b16 %v1443, %v1443
      %v1448 = vpack.c.b16 %v1444, %v1444
      %v1449 = vpack.c.b16 %v1445, %v1445
      %v1450 = vpack.c.b16 %v1446, %v1446
      %v1452 = vpack.i.b16 %v1447, %v1447
      %v1454 = vlaneseq
      %v1455 = vshrl.u32 %v1454, 7
      %v1456 = vsub.s32 3, %v1455
      %v1457 = vrot.slane %v1452, %v1456
      %v1459 = vpack.i.b16 %v1448, %v1448
      %v1461 = vlaneseq
      %v1462 = vshrl.u32 %v1461, 7
      %v1463 = vsub.s32 3, %v1462
      %v1464 = vrot.slane %v1459, %v1463
      %v1466 = vpack.i.b16 %v1449, %v1449
      %v1468 = vlaneseq
      %v1469 = vshrl.u32 %v1468, 7
      %v1470 = vsub.s32 3, %v1469
      %v1471 = vrot.slane %v1466, %v1470
      %v1473 = vpack.i.b16 %v1450, %v1450
      %v1475 = vlaneseq
      %v1476 = vshrl.u32 %v1475, 7
      %v1477 = vsub.s32 3, %v1476
      %v1478 = vrot.slane %v1473, %v1477
      %1483 = vrot.lane.b32.xlu0 %v1457, 15
      %v1484 = vpop.permute.xlu0 %1483
      %1485 = vrot.lane.b32.xlu0 %v1464, 15
      %v1486 = vpop.permute.xlu0 %1485
      %1487 = vrot.lane.b32.xlu0 %v1471, 15
      %v1488 = vpop.permute.xlu0 %1487
      %1489 = vrot.lane.b32.xlu0 %v1478, 15
      %v1490 = vpop.permute.xlu0 %1489
      %vm1491 = vcmask 121856
      %v1492 = vsel %vm1491, %v1484, %v1486
      %v1493 = vsel %vm1491, %v1486, %v1488
      %v1494 = vsel %vm1491, %v1488, %v1490
      %v1500 = vmul.bf16 %v1364, %v1484
      %v1501 = vmul.bf16 %v1365, %v1492
      %v1502 = vmul.bf16 %v1366, %v1493
      %v1503 = vmul.bf16 %v1367, %v1494
      %v1504 = vmul.bf16 %v1368, %v1490
      %v1505 = vshrl.u32 %v1447, 16
      %v1506 = vpack.i.b16 %v1505, %v1505
      %v1508 = vlaneseq
      %v1509 = vshrl.u32 %v1508, 7
      %v1510 = vsub.s32 3, %v1509
      %v1511 = vrot.slane %v1506, %v1510
      %v1512 = vshrl.u32 %v1448, 16
      %v1513 = vpack.i.b16 %v1512, %v1512
      %v1515 = vlaneseq
      %v1516 = vshrl.u32 %v1515, 7
      %v1517 = vsub.s32 3, %v1516
      %v1518 = vrot.slane %v1513, %v1517
      %v1519 = vshrl.u32 %v1449, 16
      %v1520 = vpack.i.b16 %v1519, %v1519
      %v1522 = vlaneseq
      %v1523 = vshrl.u32 %v1522, 7
      %v1524 = vsub.s32 3, %v1523
      %v1525 = vrot.slane %v1520, %v1524
      %v1526 = vshrl.u32 %v1450, 16
      %v1527 = vpack.i.b16 %v1526, %v1526
      %v1529 = vlaneseq
      %v1530 = vshrl.u32 %v1529, 7
      %v1531 = vsub.s32 3, %v1530
      %v1532 = vrot.slane %v1527, %v1531
      %1537 = vrot.lane.b32.xlu0 %v1511, 16
      %v1538 = vpop.permute.xlu0 %1537
      %1539 = vrot.lane.b32.xlu0 %v1518, 16
      %v1540 = vpop.permute.xlu0 %1539
      %1541 = vrot.lane.b32.xlu0 %v1525, 16
      %v1542 = vpop.permute.xlu0 %1541
      %1543 = vrot.lane.b32.xlu0 %v1532, 16
      %v1544 = vpop.permute.xlu0 %1543
      %vm1545 = vcmask 130048
      %v1546 = vsel %vm1545, %v1538, %v1540
      %v1547 = vsel %vm1545, %v1540, %v1542
      %v1548 = vsel %vm1545, %v1542, %v1544
      %v1554 = vmul.bf16 %v1364, %v1538
      %v1555 = vmul.bf16 %v1365, %v1546
      %v1556 = vmul.bf16 %v1366, %v1547
      %v1557 = vmul.bf16 %v1367, %v1548
      %v1558 = vmul.bf16 %v1368, %v1544
      %v1559 = vld [vmem:[%s5 + $0x10] sm:$0x11]
      %v1560 = vld [vmem:[%s5 + $0x18] sm:$0x11]
      %v1563 = vunpack.c.l.b16 %v1559
      %v1564 = vunpack.c.h.b16 %v1559
      %v1565 = vunpack.c.l.b16 %v1560
      %v1566 = vunpack.c.h.b16 %v1560
      %v1567 = vpack.c.b16 %v1563, %v1563
      %v1568 = vpack.c.b16 %v1564, %v1564
      %v1569 = vpack.c.b16 %v1565, %v1565
      %v1570 = vpack.c.b16 %v1566, %v1566
      %v1572 = vpack.i.b16 %v1567, %v1567
      %v1574 = vlaneseq
      %v1575 = vshrl.u32 %v1574, 7
      %v1576 = vsub.s32 0, %v1575
      %v1577 = vrot.slane %v1572, %v1576
      %v1579 = vpack.i.b16 %v1568, %v1568
      %v1581 = vlaneseq
      %v1582 = vshrl.u32 %v1581, 7
      %v1583 = vsub.s32 0, %v1582
      %v1584 = vrot.slane %v1579, %v1583
      %v1586 = vpack.i.b16 %v1569, %v1569
      %v1588 = vlaneseq
      %v1589 = vshrl.u32 %v1588, 7
      %v1590 = vsub.s32 0, %v1589
      %v1591 = vrot.slane %v1586, %v1590
      %v1593 = vpack.i.b16 %v1570, %v1570
      %v1595 = vlaneseq
      %v1596 = vshrl.u32 %v1595, 7
      %v1597 = vsub.s32 0, %v1596
      %v1598 = vrot.slane %v1593, %v1597
      %1603 = vrot.lane.b32.xlu0 %v1577, 17
      %v1604 = vpop.permute.xlu0 %1603
      %1605 = vrot.lane.b32.xlu0 %v1584, 17
      %v1606 = vpop.permute.xlu0 %1605
      %1607 = vrot.lane.b32.xlu0 %v1591, 17
      %v1608 = vpop.permute.xlu0 %1607
      %1609 = vrot.lane.b32.xlu0 %v1598, 17
      %v1610 = vpop.permute.xlu0 %1609
      %vm1611 = vcmask 138240
      %v1612 = vsel %vm1611, %v1604, %v1606
      %v1613 = vsel %vm1611, %v1606, %v1608
      %v1614 = vsel %vm1611, %v1608, %v1610
      %v1620 = vmul.bf16 %v1364, %v1604
      %v1621 = vmul.bf16 %v1365, %v1612
      %v1622 = vmul.bf16 %v1366, %v1613
      %v1623 = vmul.bf16 %v1367, %v1614
      %v1624 = vmul.bf16 %v1368, %v1610
      %1630 = vrot.lane.b32.xlu0 %v1240, 127
      %v1631 = vpop.permute.xlu0 %1630
      %1632 = vrot.lane.b32.xlu0 %v1241, 127
      %v1633 = vpop.permute.xlu0 %1632
      %1634 = vrot.lane.b32.xlu0 %v1242, 127
      %v1635 = vpop.permute.xlu0 %1634
      %1636 = vrot.lane.b32.xlu0 %v1243, 127
      %v1637 = vpop.permute.xlu0 %1636
      %1638 = vrot.lane.b32.xlu0 %v1244, 127
      %v1639 = vpop.permute.xlu0 %1638
      %v1640 = vsel %vm755, %v1631, %v1633
      %v1641 = vsel %vm755, %v1633, %v1635
      %v1642 = vsel %vm755, %v1635, %v1637
      %v1643 = vsel %vm755, %v1637, %v1639
      %1649 = vrot.lane.b32.xlu0 %v1306, 126
      %v1650 = vpop.permute.xlu0 %1649
      %1651 = vrot.lane.b32.xlu0 %v1307, 126
      %v1652 = vpop.permute.xlu0 %1651
      %1653 = vrot.lane.b32.xlu0 %v1308, 126
      %v1654 = vpop.permute.xlu0 %1653
      %1655 = vrot.lane.b32.xlu0 %v1309, 126
      %v1656 = vpop.permute.xlu0 %1655
      %1657 = vrot.lane.b32.xlu0 %v1310, 126
      %v1658 = vpop.permute.xlu0 %1657
      %v1659 = vsel %vm763, %v1650, %v1652
      %v1660 = vsel %vm763, %v1652, %v1654
      %v1661 = vsel %vm763, %v1654, %v1656
      %v1662 = vsel %vm763, %v1656, %v1658
      %1668 = vrot.lane.b32.xlu0 %v1359, 112
      %v1669 = vpop.permute.xlu0 %1668
      %1670 = vrot.lane.b32.xlu0 %v1360, 112
      %v1671 = vpop.permute.xlu0 %1670
      %1672 = vrot.lane.b32.xlu0 %v1361, 112
      %v1673 = vpop.permute.xlu0 %1672
      %1674 = vrot.lane.b32.xlu0 %v1362, 112
      %v1675 = vpop.permute.xlu0 %1674
      %1676 = vrot.lane.b32.xlu0 %v1363, 112
      %v1677 = vpop.permute.xlu0 %1676
      %v1678 = vsel %vm1231, %v1669, %v1671
      %v1679 = vsel %vm1231, %v1671, %v1673
      %v1680 = vsel %vm1231, %v1673, %v1675
      %v1681 = vsel %vm1231, %v1675, %v1677
      %1686 = vrot.lane.b32.xlu0 %v1121, 111
      %v1687 = vpop.permute.xlu0 %1686
      %1688 = vrot.lane.b32.xlu0 %v1122, 111
      %v1689 = vpop.permute.xlu0 %1688
      %1690 = vrot.lane.b32.xlu0 %v1123, 111
      %v1691 = vpop.permute.xlu0 %1690
      %1692 = vrot.lane.b32.xlu0 %v1124, 111
      %v1693 = vpop.permute.xlu0 %1692
      %v1694 = vsel %vm1177, %v1687, %v1689
      %v1695 = vsel %vm1177, %v1689, %v1691
      %v1696 = vsel %vm1177, %v1691, %v1693
      %1702 = vrot.lane.b32.xlu0 %v1434, 110
      %v1703 = vpop.permute.xlu0 %1702
      %1704 = vrot.lane.b32.xlu0 %v1435, 110
      %v1705 = vpop.permute.xlu0 %1704
      %1706 = vrot.lane.b32.xlu0 %v1436, 110
      %v1707 = vpop.permute.xlu0 %1706
      %1708 = vrot.lane.b32.xlu0 %v1437, 110
      %v1709 = vpop.permute.xlu0 %1708
      %1710 = vrot.lane.b32.xlu0 %v1438, 110
      %v1711 = vpop.permute.xlu0 %1710
      %vm1712 = vcmask 900096
      %v1713 = vsel %vm1712, %v1703, %v1705
      %v1714 = vsel %vm1712, %v1705, %v1707
      %v1715 = vsel %vm1712, %v1707, %v1709
      %v1716 = vsel %vm1712, %v1709, %v1711
      %1722 = vrot.lane.b32.xlu0 %v1500, 96
      %v1723 = vpop.permute.xlu0 %1722
      %1724 = vrot.lane.b32.xlu0 %v1501, 96
      %v1725 = vpop.permute.xlu0 %1724
      %1726 = vrot.lane.b32.xlu0 %v1502, 96
      %v1727 = vpop.permute.xlu0 %1726
      %1728 = vrot.lane.b32.xlu0 %v1503, 96
      %v1729 = vpop.permute.xlu0 %1728
      %1730 = vrot.lane.b32.xlu0 %v1504, 96
      %v1731 = vpop.permute.xlu0 %1730
      %vm1732 = vcmask 785408
      %v1733 = vsel %vm1732, %v1723, %v1725
      %v1734 = vsel %vm1732, %v1725, %v1727
      %v1735 = vsel %vm1732, %v1727, %v1729
      %v1736 = vsel %vm1732, %v1729, %v1731
      %1742 = vrot.lane.b32.xlu0 %v1554, 95
      %v1743 = vpop.permute.xlu0 %1742
      %1744 = vrot.lane.b32.xlu0 %v1555, 95
      %v1745 = vpop.permute.xlu0 %1744
      %1746 = vrot.lane.b32.xlu0 %v1556, 95
      %v1747 = vpop.permute.xlu0 %1746
      %1748 = vrot.lane.b32.xlu0 %v1557, 95
      %v1749 = vpop.permute.xlu0 %1748
      %1750 = vrot.lane.b32.xlu0 %v1558, 95
      %v1751 = vpop.permute.xlu0 %1750
      %vm1752 = vcmask 777216
      %v1753 = vsel %vm1752, %v1743, %v1745
      %v1754 = vsel %vm1752, %v1745, %v1747
      %v1755 = vsel %vm1752, %v1747, %v1749
      %v1756 = vsel %vm1752, %v1749, %v1751
      %1762 = vrot.lane.b32.xlu0 %v1620, 94
      %v1763 = vpop.permute.xlu0 %1762
      %1764 = vrot.lane.b32.xlu0 %v1621, 94
      %v1765 = vpop.permute.xlu0 %1764
      %1766 = vrot.lane.b32.xlu0 %v1622, 94
      %v1767 = vpop.permute.xlu0 %1766
      %1768 = vrot.lane.b32.xlu0 %v1623, 94
      %v1769 = vpop.permute.xlu0 %1768
      %1770 = vrot.lane.b32.xlu0 %v1624, 94
      %v1771 = vpop.permute.xlu0 %1770
      %vm1772 = vcmask 769024
      %v1773 = vsel %vm1772, %v1763, %v1765
      %v1774 = vsel %vm1772, %v1765, %v1767
      %v1775 = vsel %vm1772, %v1767, %v1769
      %v1776 = vsel %vm1772, %v1769, %v1771
      %s1777 = scalar_lea.vmem %s3, 16
      %v1778 = vld [vmem:[%s1777] sm:$0xff]
      %v1779 = vld [vmem:[%s1777 + $0x8] sm:$0xff]
      %s1780 = scalar_lea.vmem %s4, 16
      %v1781 = vld [vmem:[%s1780] sm:$0xff]
      %v1782 = vld [vmem:[%s1780 + $0x8] sm:$0xff]
      %1784 = vset.pattern.permute.xlu0 0
      %1785 = vperm.xlu0 %1784, %v1781
      %v1786 = vpop.permute.xlu0 %1785
      %1789 = vset.pattern.permute.xlu0 0
      %1790 = vperm.xlu0 %1789, %v1782
      %v1791 = vpop.permute.xlu0 %1790
      %v1795 = vunpack.c.l.b16 %v1778
      %v1796 = vunpack.c.h.b16 %v1778
      %v1797 = vunpack.c.l.b16 %v1779
      %v1798 = vunpack.c.h.b16 %v1779
      %v1799 = vpack.c.b16 %v1797, %v1795
      %v1800 = vpack.c.b16 %v1798, %v1796
      %1807 = vrot.lane.b32.xlu0 %v1186, 17
      %v1808 = vpop.permute.xlu0 %1807
      %1809 = vrot.lane.b32.xlu0 %v1187, 17
      %v1810 = vpop.permute.xlu0 %1809
      %1811 = vrot.lane.b32.xlu0 %v1188, 17
      %v1812 = vpop.permute.xlu0 %1811
      %1813 = vrot.lane.b32.xlu0 %v1189, 17
      %v1814 = vpop.permute.xlu0 %1813
      %1815 = vrot.lane.b32.xlu0 %v1190, 17
      %v1816 = vpop.permute.xlu0 %1815
      %1817 = vrot.lane.b32.xlu0 %v1640, 17
      %v1818 = vpop.permute.xlu0 %1817
      %1819 = vrot.lane.b32.xlu0 %v1641, 17
      %v1820 = vpop.permute.xlu0 %1819
      %1821 = vrot.lane.b32.xlu0 %v1642, 17
      %v1822 = vpop.permute.xlu0 %1821
      %1823 = vrot.lane.b32.xlu0 %v1643, 17
      %v1824 = vpop.permute.xlu0 %1823
      %1825 = vrot.lane.b32.xlu0 %v1639, 17
      %v1826 = vpop.permute.xlu0 %1825
      %1827 = vrot.lane.b32.xlu0 %v1659, 17
      %v1828 = vpop.permute.xlu0 %1827
      %1829 = vrot.lane.b32.xlu0 %v1660, 17
      %v1830 = vpop.permute.xlu0 %1829
      %1831 = vrot.lane.b32.xlu0 %v1661, 17
      %v1832 = vpop.permute.xlu0 %1831
      %1833 = vrot.lane.b32.xlu0 %v1662, 17
      %v1834 = vpop.permute.xlu0 %1833
      %1835 = vrot.lane.b32.xlu0 %v1658, 17
      %v1836 = vpop.permute.xlu0 %1835
      %1837 = vrot.lane.b32.xlu0 %v1678, 17
      %v1838 = vpop.permute.xlu0 %1837
      %1839 = vrot.lane.b32.xlu0 %v1679, 17
      %v1840 = vpop.permute.xlu0 %1839
      %1841 = vrot.lane.b32.xlu0 %v1680, 17
      %v1842 = vpop.permute.xlu0 %1841
      %1843 = vrot.lane.b32.xlu0 %v1681, 17
      %v1844 = vpop.permute.xlu0 %1843
      %1845 = vrot.lane.b32.xlu0 %v1677, 17
      %v1846 = vpop.permute.xlu0 %1845
      %1847 = vrot.lane.b32.xlu0 %v1687, 17
      %v1848 = vpop.permute.xlu0 %1847
      %1849 = vrot.lane.b32.xlu0 %v1694, 17
      %v1850 = vpop.permute.xlu0 %1849
      %1851 = vrot.lane.b32.xlu0 %v1695, 17
      %v1852 = vpop.permute.xlu0 %1851
      %1853 = vrot.lane.b32.xlu0 %v1696, 17
      %v1854 = vpop.permute.xlu0 %1853
      %1855 = vrot.lane.b32.xlu0 %v1693, 17
      %v1856 = vpop.permute.xlu0 %1855
      %1857 = vrot.lane.b32.xlu0 %v1703, 17
      %v1858 = vpop.permute.xlu0 %1857
      %1859 = vrot.lane.b32.xlu0 %v1713, 17
      %v1860 = vpop.permute.xlu0 %1859
      %1861 = vrot.lane.b32.xlu0 %v1714, 17
      %v1862 = vpop.permute.xlu0 %1861
      %1863 = vrot.lane.b32.xlu0 %v1715, 17
      %v1864 = vpop.permute.xlu0 %1863
      %1865 = vrot.lane.b32.xlu0 %v1716, 17
      %v1866 = vpop.permute.xlu0 %1865
      %1867 = vrot.lane.b32.xlu0 %v1723, 17
      %v1868 = vpop.permute.xlu0 %1867
      %1869 = vrot.lane.b32.xlu0 %v1733, 17
      %v1870 = vpop.permute.xlu0 %1869
      %1871 = vrot.lane.b32.xlu0 %v1734, 17
      %v1872 = vpop.permute.xlu0 %1871
      %1873 = vrot.lane.b32.xlu0 %v1735, 17
      %v1874 = vpop.permute.xlu0 %1873
      %1875 = vrot.lane.b32.xlu0 %v1736, 17
      %v1876 = vpop.permute.xlu0 %1875
      %1877 = vrot.lane.b32.xlu0 %v1743, 17
      %v1878 = vpop.permute.xlu0 %1877
      %1879 = vrot.lane.b32.xlu0 %v1753, 17
      %v1880 = vpop.permute.xlu0 %1879
      %1881 = vrot.lane.b32.xlu0 %v1754, 17
      %v1882 = vpop.permute.xlu0 %1881
      %1883 = vrot.lane.b32.xlu0 %v1755, 17
      %v1884 = vpop.permute.xlu0 %1883
      %1885 = vrot.lane.b32.xlu0 %v1756, 17
      %v1886 = vpop.permute.xlu0 %1885
      %1887 = vrot.lane.b32.xlu0 %v1763, 17
      %v1888 = vpop.permute.xlu0 %1887
      %1889 = vrot.lane.b32.xlu0 %v1773, 17
      %v1890 = vpop.permute.xlu0 %1889
      %1891 = vrot.lane.b32.xlu0 %v1774, 17
      %v1892 = vpop.permute.xlu0 %1891
      %1893 = vrot.lane.b32.xlu0 %v1775, 17
      %v1894 = vpop.permute.xlu0 %1893
      %1895 = vrot.lane.b32.xlu0 %v1776, 17
      %v1896 = vpop.permute.xlu0 %1895
      %v1897 = vsel %vm1611, %v1808, %v1810
      %v1898 = vsel %vm1611, %v1810, %v1812
      %v1899 = vsel %vm1611, %v1812, %v1814
      %v1900 = vsel %vm1611, %v1814, %v1816
      %v1901 = vsel %vm1611, %v1818, %v1820
      %v1902 = vsel %vm1611, %v1820, %v1822
      %v1903 = vsel %vm1611, %v1822, %v1824
      %v1904 = vsel %vm1611, %v1824, %v1826
      %v1905 = vsel %vm1611, %v1828, %v1830
      %v1906 = vsel %vm1611, %v1830, %v1832
      %v1907 = vsel %vm1611, %v1832, %v1834
      %v1908 = vsel %vm1611, %v1834, %v1836
      %v1909 = vsel %vm1611, %v1838, %v1840
      %v1910 = vsel %vm1611, %v1840, %v1842
      %v1911 = vsel %vm1611, %v1842, %v1844
      %v1912 = vsel %vm1611, %v1844, %v1846
      %v1913 = vsel %vm1611, %v1848, %v1850
      %v1914 = vsel %vm1611, %v1850, %v1852
      %v1915 = vsel %vm1611, %v1852, %v1854
      %v1916 = vsel %vm1611, %v1854, %v1856
      %v1917 = vsel %vm1611, %v1858, %v1860
      %v1918 = vsel %vm1611, %v1860, %v1862
      %v1919 = vsel %vm1611, %v1862, %v1864
      %v1920 = vsel %vm1611, %v1864, %v1866
      %v1921 = vsel %vm1611, %v1868, %v1870
      %v1922 = vsel %vm1611, %v1870, %v1872
      %v1923 = vsel %vm1611, %v1872, %v1874
      %v1924 = vsel %vm1611, %v1874, %v1876
      %v1925 = vsel %vm1611, %v1878, %v1880
      %v1926 = vsel %vm1611, %v1880, %v1882
      %v1927 = vsel %vm1611, %v1882, %v1884
      %v1928 = vsel %vm1611, %v1884, %v1886
      %v1929 = vsel %vm1611, %v1888, %v1890
      %v1930 = vsel %vm1611, %v1890, %v1892
      %v1931 = vsel %vm1611, %v1892, %v1894
      %v1932 = vsel %vm1611, %v1894, %v1896
      %v1970 = vsel %vm853, %v1800, 0
      %1972 = vmatprep.subr.bf16.mxu0 %v1898
      %1973 = vmatpush1.bf16.msra.mxu0 %v1897
      %1974 = vmatprep.subr.bf16.mxu0 %v1902
      %1975 = vmatpush1.bf16.msra.mxu0 %v1901
      %1976 = vmatprep.subr.bf16.mxu0 %v1906
      %1977 = vmatpush1.bf16.msra.mxu0 %v1905
      %1978 = vmatprep.subr.bf16.mxu0 %v1910
      %1979 = vmatpush1.bf16.msra.mxu0 %v1909
      %1980 = vmatprep.subr.bf16.mxu0 %v1914
      %1981 = vmatpush1.bf16.msra.mxu0 %v1913
      %1982 = vmatprep.subr.bf16.mxu0 %v1918
      %1983 = vmatpush1.bf16.msra.mxu0 %v1917
      %1984 = vmatprep.subr.bf16.mxu0 %v1922
      %1985 = vmatpush1.bf16.msra.mxu0 %v1921
      %1986 = vmatprep.subr.bf16.mxu0 %v1926
      %1987 = vmatpush1.bf16.msra.mxu0 %v1925
      %1988 = vmatprep.subr.bf16.mxu0 %v1930
      %1989 = vmatpush1.bf16.msra.mxu0 %v1929
      %1990 = vmatprep.subr.bf16.mxu0 0
      %1991 = vmatpush1.bf16.msra.mxu0 0
      %1992 = vmatprep.subr.bf16.mxu0 0
      %1993 = vmatpush1.bf16.msra.mxu0 0
      %1994 = vmatprep.subr.bf16.mxu0 0
      %1995 = vmatpush1.bf16.msra.mxu0 0
      %1996 = vmatprep.subr.bf16.mxu0 0
      %1997 = vmatpush1.bf16.msra.mxu0 0
      %1998 = vmatprep.subr.bf16.mxu0 0
      %1999 = vmatpush1.bf16.msra.mxu0 0
      %2000 = vmatprep.subr.bf16.mxu0 0
      %2001 = vmatpush1.bf16.msra.mxu0 0
      %2002 = vmatprep.subr.bf16.mxu0 0
      %2003 = vmatpush1.bf16.msra.mxu0 0
      %2004 = vmatprep.mubr.bf16.mxu0 %v1970
      %2005 = vmatmul.mubr.bf16.gmra.mrb[0].mxu0 %v1799
      %v2006 = vpop.f32.mrb[0].mxu0
      %v2007 = vadd.f32 %v1786, %v2006
      %v2008 = vpop.f32.mrb[0].mxu0
      %v2009 = vadd.f32 %v1786, %v2008
      %v2010 = vpop.f32.mrb[0].mxu0
      %v2011 = vadd.f32 %v1791, %v2010
      %v2012 = vpop.f32.mrb[0].mxu0
      %v2013 = vadd.f32 %v1791, %v2012
      %2014 = vdwg.mxu0
      %2015 = vmatprep.subr.bf16.mxu0 %v1900
      %2016 = vmatpush1.bf16.msra.mxu0 %v1899
      %2017 = vmatprep.subr.bf16.mxu0 %v1904
      %2018 = vmatpush1.bf16.msra.mxu0 %v1903
      %2019 = vmatprep.subr.bf16.mxu0 %v1908
      %2020 = vmatpush1.bf16.msra.mxu0 %v1907
      %2021 = vmatprep.subr.bf16.mxu0 %v1912
      %2022 = vmatpush1.bf16.msra.mxu0 %v1911
      %2023 = vmatprep.subr.bf16.mxu0 %v1916
      %2024 = vmatpush1.bf16.msra.mxu0 %v1915
      %2025 = vmatprep.subr.bf16.mxu0 %v1920
      %2026 = vmatpush1.bf16.msra.mxu0 %v1919
      %2027 = vmatprep.subr.bf16.mxu0 %v1924
      %2028 = vmatpush1.bf16.msra.mxu0 %v1923
      %2029 = vmatprep.subr.bf16.mxu0 %v1928
      %2030 = vmatpush1.bf16.msra.mxu0 %v1927
      %2031 = vmatprep.subr.bf16.mxu0 %v1932
      %2032 = vmatpush1.bf16.msra.mxu0 %v1931
      %2033 = vmatprep.subr.bf16.mxu0 0
      %2034 = vmatpush1.bf16.msra.mxu0 0
      %2035 = vmatprep.subr.bf16.mxu0 0
      %2036 = vmatpush1.bf16.msra.mxu0 0
      %2037 = vmatprep.subr.bf16.mxu0 0
      %2038 = vmatpush1.bf16.msra.mxu0 0
      %2039 = vmatprep.subr.bf16.mxu0 0
      %2040 = vmatpush1.bf16.msra.mxu0 0
      %2041 = vmatprep.subr.bf16.mxu0 0
      %2042 = vmatpush1.bf16.msra.mxu0 0
      %2043 = vmatprep.subr.bf16.mxu0 0
      %2044 = vmatpush1.bf16.msra.mxu0 0
      %2045 = vmatprep.subr.bf16.mxu0 0
      %2046 = vmatpush1.bf16.msra.mxu0 0
      %2047 = vmatprep.mubr.bf16.mxu0 %v1970
      %2048 = vmatmul.mubr.bf16.gmra.mrb[0].mxu0 %v1799
      %v2049 = vpop.f32.mrb[0].mxu0
      %v2050 = vadd.f32 %v1786, %v2049
      %v2051 = vpop.f32.mrb[0].mxu0
      %v2052 = vadd.f32 %v1786, %v2051
      %v2053 = vpop.f32.mrb[0].mxu0
      %v2054 = vadd.f32 %v1791, %v2053
      %v2055 = vpop.f32.mrb[0].mxu0
      %v2056 = vadd.f32 %v1791, %v2055
      %2057 = vdwg.mxu0
      %v2058 = vmul.f32 %v2007, %v1108
      %v2059 = vmul.f32 %v2009, %v1109
      %v2060 = vmul.f32 %v2050, %v1110
      %v2061 = vmul.f32 %v2052, %v1111
      %v2062 = vmul.f32 %v2011, %v1112
      %v2063 = vmul.f32 %v2013, %v1113
      %v2064 = vmul.f32 %v2054, %v1114
      %v2065 = vmul.f32 %v2056, %v1115
      %v2066 = vpack.c.bf16 %v2062, %v2058
      %v2067 = vpack.c.bf16 %v2063, %v2059
      %v2068 = vpack.c.bf16 %v2064, %v2060
      %v2069 = vpack.c.bf16 %v2065, %v2061
      %2070 = vst [vmem:[#allocation2 + $0x8] sm:$0xff] %v2066
      %2071 = vst [vmem:[#allocation2 + $0x10] sm:$0xff] %v2067
      %2072 = vst [vmem:[#allocation2 + $0x18] sm:$0xff] %v2068
      %2073 = vst [vmem:[#allocation2 + $0x20] sm:$0xff] %v2069
      %v2074 = vld [vmem:[#allocation2] sm:$0xff]
      %v2075 = vld [vmem:[#allocation2 + $0x8] sm:$0xff]
      %v2076 = vld [vmem:[#allocation2 + $0x10] sm:$0xff]
      %v2077 = vld [vmem:[#allocation2 + $0x18] sm:$0xff]
      %v2078 = vld [vmem:[#allocation2 + $0x20] sm:$0xff]
      %v2079 = vld [vmem:[%s5] sm:$0x11]
      %v2080 = vld [vmem:[%s5 + $0x8] sm:$0x11]
      %v2083 = vunpack.c.l.b16 %v2079
      %v2084 = vunpack.c.h.b16 %v2079
      %v2085 = vunpack.c.l.b16 %v2080
      %v2086 = vunpack.c.h.b16 %v2080
      %v2087 = vpack.c.b16 %v2083, %v2083
      %v2088 = vpack.c.b16 %v2084, %v2084
      %v2089 = vpack.c.b16 %v2085, %v2085
      %v2090 = vpack.c.b16 %v2086, %v2086
      %v2092 = vpack.i.b16 %v2087, %v2087
      %v2094 = vlaneseq
      %v2095 = vshrl.u32 %v2094, 7
      %v2096 = vsub.s32 0, %v2095
      %v2097 = vrot.slane %v2092, %v2096
      %v2099 = vpack.i.b16 %v2088, %v2088
      %v2101 = vlaneseq
      %v2102 = vshrl.u32 %v2101, 7
      %v2103 = vsub.s32 0, %v2102
      %v2104 = vrot.slane %v2099, %v2103
      %v2106 = vpack.i.b16 %v2089, %v2089
      %v2108 = vlaneseq
      %v2109 = vshrl.u32 %v2108, 7
      %v2110 = vsub.s32 0, %v2109
      %v2111 = vrot.slane %v2106, %v2110
      %v2113 = vpack.i.b16 %v2090, %v2090
      %v2115 = vlaneseq
      %v2116 = vshrl.u32 %v2115, 7
      %v2117 = vsub.s32 0, %v2116
      %v2118 = vrot.slane %v2113, %v2117
      %2123 = vrot.lane.b32.xlu0 %v2097, 111
      %v2124 = vpop.permute.xlu0 %2123
      %2125 = vrot.lane.b32.xlu0 %v2104, 111
      %v2126 = vpop.permute.xlu0 %2125
      %2127 = vrot.lane.b32.xlu0 %v2111, 111
      %v2128 = vpop.permute.xlu0 %2127
      %2129 = vrot.lane.b32.xlu0 %v2118, 111
      %v2130 = vpop.permute.xlu0 %2129
      %v2131 = vsel %vm1177, %v2124, %v2126
      %v2132 = vsel %vm1177, %v2126, %v2128
      %v2133 = vsel %vm1177, %v2128, %v2130
      %v2139 = vmul.bf16 %v2074, %v2124
      %v2140 = vmul.bf16 %v2075, %v2131
      %v2141 = vmul.bf16 %v2076, %v2132
      %v2142 = vmul.bf16 %v2077, %v2133
      %v2143 = vmul.bf16 %v2078, %v2130
      %v2144 = vshrl.u32 %v2087, 16
      %v2145 = vpack.i.b16 %v2144, %v2144
      %v2147 = vlaneseq
      %v2148 = vshrl.u32 %v2147, 7
      %v2149 = vsub.s32 0, %v2148
      %v2150 = vrot.slane %v2145, %v2149
      %v2151 = vshrl.u32 %v2088, 16
      %v2152 = vpack.i.b16 %v2151, %v2151
      %v2154 = vlaneseq
      %v2155 = vshrl.u32 %v2154, 7
      %v2156 = vsub.s32 0, %v2155
      %v2157 = vrot.slane %v2152, %v2156
      %v2158 = vshrl.u32 %v2089, 16
      %v2159 = vpack.i.b16 %v2158, %v2158
      %v2161 = vlaneseq
      %v2162 = vshrl.u32 %v2161, 7
      %v2163 = vsub.s32 0, %v2162
      %v2164 = vrot.slane %v2159, %v2163
      %v2165 = vshrl.u32 %v2090, 16
      %v2166 = vpack.i.b16 %v2165, %v2165
      %v2168 = vlaneseq
      %v2169 = vshrl.u32 %v2168, 7
      %v2170 = vsub.s32 0, %v2169
      %v2171 = vrot.slane %v2166, %v2170
      %2176 = vrot.lane.b32.xlu0 %v2150, 112
      %v2177 = vpop.permute.xlu0 %2176
      %2178 = vrot.lane.b32.xlu0 %v2157, 112
      %v2179 = vpop.permute.xlu0 %2178
      %2180 = vrot.lane.b32.xlu0 %v2164, 112
      %v2181 = vpop.permute.xlu0 %2180
      %2182 = vrot.lane.b32.xlu0 %v2171, 112
      %v2183 = vpop.permute.xlu0 %2182
      %v2184 = vsel %vm1231, %v2177, %v2179
      %v2185 = vsel %vm1231, %v2179, %v2181
      %v2186 = vsel %vm1231, %v2181, %v2183
      %v2192 = vmul.bf16 %v2074, %v2177
      %v2193 = vmul.bf16 %v2075, %v2184
      %v2194 = vmul.bf16 %v2076, %v2185
      %v2195 = vmul.bf16 %v2077, %v2186
      %v2196 = vmul.bf16 %v2078, %v2183
      %v2197 = vld [vmem:[%s5] sm:$0x22]
      %v2198 = vld [vmem:[%s5 + $0x8] sm:$0x22]
      %v2201 = vunpack.c.l.b16 %v2197
      %v2202 = vunpack.c.h.b16 %v2197
      %v2203 = vunpack.c.l.b16 %v2198
      %v2204 = vunpack.c.h.b16 %v2198
      %v2205 = vpack.c.b16 %v2201, %v2201
      %v2206 = vpack.c.b16 %v2202, %v2202
      %v2207 = vpack.c.b16 %v2203, %v2203
      %v2208 = vpack.c.b16 %v2204, %v2204
      %v2210 = vpack.i.b16 %v2205, %v2205
      %v2212 = vlaneseq
      %v2213 = vshrl.u32 %v2212, 7
      %v2214 = vsub.s32 1, %v2213
      %v2215 = vrot.slane %v2210, %v2214
      %v2217 = vpack.i.b16 %v2206, %v2206
      %v2219 = vlaneseq
      %v2220 = vshrl.u32 %v2219, 7
      %v2221 = vsub.s32 1, %v2220
      %v2222 = vrot.slane %v2217, %v2221
      %v2224 = vpack.i.b16 %v2207, %v2207
      %v2226 = vlaneseq
      %v2227 = vshrl.u32 %v2226, 7
      %v2228 = vsub.s32 1, %v2227
      %v2229 = vrot.slane %v2224, %v2228
      %v2231 = vpack.i.b16 %v2208, %v2208
      %v2233 = vlaneseq
      %v2234 = vshrl.u32 %v2233, 7
      %v2235 = vsub.s32 1, %v2234
      %v2236 = vrot.slane %v2231, %v2235
      %2241 = vrot.lane.b32.xlu0 %v2215, 113
      %v2242 = vpop.permute.xlu0 %2241
      %2243 = vrot.lane.b32.xlu0 %v2222, 113
      %v2244 = vpop.permute.xlu0 %2243
      %2245 = vrot.lane.b32.xlu0 %v2229, 113
      %v2246 = vpop.permute.xlu0 %2245
      %2247 = vrot.lane.b32.xlu0 %v2236, 113
      %v2248 = vpop.permute.xlu0 %2247
      %v2249 = vsel %vm1297, %v2242, %v2244
      %v2250 = vsel %vm1297, %v2244, %v2246
      %v2251 = vsel %vm1297, %v2246, %v2248
      %v2257 = vmul.bf16 %v2074, %v2242
      %v2258 = vmul.bf16 %v2075, %v2249
      %v2259 = vmul.bf16 %v2076, %v2250
      %v2260 = vmul.bf16 %v2077, %v2251
      %v2261 = vmul.bf16 %v2078, %v2248
      %v2262 = vshrl.u32 %v2205, 16
      %v2263 = vpack.i.b16 %v2262, %v2262
      %v2265 = vlaneseq
      %v2266 = vshrl.u32 %v2265, 7
      %v2267 = vsub.s32 1, %v2266
      %v2268 = vrot.slane %v2263, %v2267
      %v2269 = vshrl.u32 %v2206, 16
      %v2270 = vpack.i.b16 %v2269, %v2269
      %v2272 = vlaneseq
      %v2273 = vshrl.u32 %v2272, 7
      %v2274 = vsub.s32 1, %v2273
      %v2275 = vrot.slane %v2270, %v2274
      %v2276 = vshrl.u32 %v2207, 16
      %v2277 = vpack.i.b16 %v2276, %v2276
      %v2279 = vlaneseq
      %v2280 = vshrl.u32 %v2279, 7
      %v2281 = vsub.s32 1, %v2280
      %v2282 = vrot.slane %v2277, %v2281
      %v2283 = vshrl.u32 %v2208, 16
      %v2284 = vpack.i.b16 %v2283, %v2283
      %v2286 = vlaneseq
      %v2287 = vshrl.u32 %v2286, 7
      %v2288 = vsub.s32 1, %v2287
      %v2289 = vrot.slane %v2284, %v2288
      %2294 = vrot.lane.b32.xlu0 %v2268, 127
      %v2295 = vpop.permute.xlu0 %2294
      %2296 = vrot.lane.b32.xlu0 %v2275, 127
      %v2297 = vpop.permute.xlu0 %2296
      %2298 = vrot.lane.b32.xlu0 %v2282, 127
      %v2299 = vpop.permute.xlu0 %2298
      %2300 = vrot.lane.b32.xlu0 %v2289, 127
      %v2301 = vpop.permute.xlu0 %2300
      %v2302 = vsel %vm755, %v2295, %v2297
      %v2303 = vsel %vm755, %v2297, %v2299
      %v2304 = vsel %vm755, %v2299, %v2301
      %v2310 = vmul.bf16 %v2074, %v2295
      %v2311 = vmul.bf16 %v2075, %v2302
      %v2312 = vmul.bf16 %v2076, %v2303
      %v2313 = vmul.bf16 %v2077, %v2304
      %v2314 = vmul.bf16 %v2078, %v2301
      %v2315 = vld [vmem:[#allocation2 + $0x8] sm:$0xff]
      %v2316 = vld [vmem:[#allocation2 + $0x10] sm:$0xff]
      %v2317 = vld [vmem:[#allocation2 + $0x18] sm:$0xff]
      %v2318 = vld [vmem:[#allocation2 + $0x20] sm:$0xff]
      %v2319 = vld [vmem:[#allocation2 + $0x28] sm:$0xff]
      %v2320 = vld [vmem:[%s5] sm:$0x44]
      %v2321 = vld [vmem:[%s5 + $0x8] sm:$0x44]
      %v2324 = vunpack.c.l.b16 %v2320
      %v2325 = vunpack.c.h.b16 %v2320
      %v2326 = vunpack.c.l.b16 %v2321
      %v2327 = vunpack.c.h.b16 %v2321
      %v2328 = vpack.c.b16 %v2324, %v2324
      %v2329 = vpack.c.b16 %v2325, %v2325
      %v2330 = vpack.c.b16 %v2326, %v2326
      %v2331 = vpack.c.b16 %v2327, %v2327
      %v2333 = vshrl.u32 %v2328, 16
      %v2334 = vpack.i.b16 %v2333, %v2333
      %v2336 = vlaneseq
      %v2337 = vshrl.u32 %v2336, 7
      %v2338 = vsub.s32 2, %v2337
      %v2339 = vrot.slane %v2334, %v2338
      %v2341 = vshrl.u32 %v2329, 16
      %v2342 = vpack.i.b16 %v2341, %v2341
      %v2344 = vlaneseq
      %v2345 = vshrl.u32 %v2344, 7
      %v2346 = vsub.s32 2, %v2345
      %v2347 = vrot.slane %v2342, %v2346
      %v2349 = vshrl.u32 %v2330, 16
      %v2350 = vpack.i.b16 %v2349, %v2349
      %v2352 = vlaneseq
      %v2353 = vshrl.u32 %v2352, 7
      %v2354 = vsub.s32 2, %v2353
      %v2355 = vrot.slane %v2350, %v2354
      %v2357 = vshrl.u32 %v2331, 16
      %v2358 = vpack.i.b16 %v2357, %v2357
      %v2360 = vlaneseq
      %v2361 = vshrl.u32 %v2360, 7
      %v2362 = vsub.s32 2, %v2361
      %v2363 = vrot.slane %v2358, %v2362
      %2368 = vrot.lane.b32.xlu0 %v2339, 1
      %v2369 = vpop.permute.xlu0 %2368
      %2370 = vrot.lane.b32.xlu0 %v2347, 1
      %v2371 = vpop.permute.xlu0 %2370
      %2372 = vrot.lane.b32.xlu0 %v2355, 1
      %v2373 = vpop.permute.xlu0 %2372
      %2374 = vrot.lane.b32.xlu0 %v2363, 1
      %v2375 = vpop.permute.xlu0 %2374
      %v2376 = vsel %vm1425, %v2369, %v2371
      %v2377 = vsel %vm1425, %v2371, %v2373
      %v2378 = vsel %vm1425, %v2373, %v2375
      %v2384 = vmul.bf16 %v2315, %v2369
      %v2385 = vmul.bf16 %v2316, %v2376
      %v2386 = vmul.bf16 %v2317, %v2377
      %v2387 = vmul.bf16 %v2318, %v2378
      %v2388 = vmul.bf16 %v2319, %v2375
      %v2389 = vld [vmem:[%s5] sm:$0x88]
      %v2390 = vld [vmem:[%s5 + $0x8] sm:$0x88]
      %v2393 = vunpack.c.l.b16 %v2389
      %v2394 = vunpack.c.h.b16 %v2389
      %v2395 = vunpack.c.l.b16 %v2390
      %v2396 = vunpack.c.h.b16 %v2390
      %v2397 = vpack.c.b16 %v2393, %v2393
      %v2398 = vpack.c.b16 %v2394, %v2394
      %v2399 = vpack.c.b16 %v2395, %v2395
      %v2400 = vpack.c.b16 %v2396, %v2396
      %v2402 = vpack.i.b16 %v2397, %v2397
      %v2404 = vlaneseq
      %v2405 = vshrl.u32 %v2404, 7
      %v2406 = vsub.s32 3, %v2405
      %v2407 = vrot.slane %v2402, %v2406
      %v2409 = vpack.i.b16 %v2398, %v2398
      %v2411 = vlaneseq
      %v2412 = vshrl.u32 %v2411, 7
      %v2413 = vsub.s32 3, %v2412
      %v2414 = vrot.slane %v2409, %v2413
      %v2416 = vpack.i.b16 %v2399, %v2399
      %v2418 = vlaneseq
      %v2419 = vshrl.u32 %v2418, 7
      %v2420 = vsub.s32 3, %v2419
      %v2421 = vrot.slane %v2416, %v2420
      %v2423 = vpack.i.b16 %v2400, %v2400
      %v2425 = vlaneseq
      %v2426 = vshrl.u32 %v2425, 7
      %v2427 = vsub.s32 3, %v2426
      %v2428 = vrot.slane %v2423, %v2427
      %2433 = vrot.lane.b32.xlu0 %v2407, 15
      %v2434 = vpop.permute.xlu0 %2433
      %2435 = vrot.lane.b32.xlu0 %v2414, 15
      %v2436 = vpop.permute.xlu0 %2435
      %2437 = vrot.lane.b32.xlu0 %v2421, 15
      %v2438 = vpop.permute.xlu0 %2437
      %2439 = vrot.lane.b32.xlu0 %v2428, 15
      %v2440 = vpop.permute.xlu0 %2439
      %v2441 = vsel %vm1491, %v2434, %v2436
      %v2442 = vsel %vm1491, %v2436, %v2438
      %v2443 = vsel %vm1491, %v2438, %v2440
      %v2449 = vmul.bf16 %v2315, %v2434
      %v2450 = vmul.bf16 %v2316, %v2441
      %v2451 = vmul.bf16 %v2317, %v2442
      %v2452 = vmul.bf16 %v2318, %v2443
      %v2453 = vmul.bf16 %v2319, %v2440
      %v2454 = vshrl.u32 %v2397, 16
      %v2455 = vpack.i.b16 %v2454, %v2454
      %v2457 = vlaneseq
      %v2458 = vshrl.u32 %v2457, 7
      %v2459 = vsub.s32 3, %v2458
      %v2460 = vrot.slane %v2455, %v2459
      %v2461 = vshrl.u32 %v2398, 16
      %v2462 = vpack.i.b16 %v2461, %v2461
      %v2464 = vlaneseq
      %v2465 = vshrl.u32 %v2464, 7
      %v2466 = vsub.s32 3, %v2465
      %v2467 = vrot.slane %v2462, %v2466
      %v2468 = vshrl.u32 %v2399, 16
      %v2469 = vpack.i.b16 %v2468, %v2468
      %v2471 = vlaneseq
      %v2472 = vshrl.u32 %v2471, 7
      %v2473 = vsub.s32 3, %v2472
      %v2474 = vrot.slane %v2469, %v2473
      %v2475 = vshrl.u32 %v2400, 16
      %v2476 = vpack.i.b16 %v2475, %v2475
      %v2478 = vlaneseq
      %v2479 = vshrl.u32 %v2478, 7
      %v2480 = vsub.s32 3, %v2479
      %v2481 = vrot.slane %v2476, %v2480
      %2486 = vrot.lane.b32.xlu0 %v2460, 16
      %v2487 = vpop.permute.xlu0 %2486
      %2488 = vrot.lane.b32.xlu0 %v2467, 16
      %v2489 = vpop.permute.xlu0 %2488
      %2490 = vrot.lane.b32.xlu0 %v2474, 16
      %v2491 = vpop.permute.xlu0 %2490
      %2492 = vrot.lane.b32.xlu0 %v2481, 16
      %v2493 = vpop.permute.xlu0 %2492
      %v2494 = vsel %vm1545, %v2487, %v2489
      %v2495 = vsel %vm1545, %v2489, %v2491
      %v2496 = vsel %vm1545, %v2491, %v2493
      %v2502 = vmul.bf16 %v2315, %v2487
      %v2503 = vmul.bf16 %v2316, %v2494
      %v2504 = vmul.bf16 %v2317, %v2495
      %v2505 = vmul.bf16 %v2318, %v2496
      %v2506 = vmul.bf16 %v2319, %v2493
      %v2507 = vld [vmem:[%s5 + $0x10] sm:$0x11]
      %v2508 = vld [vmem:[%s5 + $0x18] sm:$0x11]
      %v2511 = vunpack.c.l.b16 %v2507
      %v2512 = vunpack.c.h.b16 %v2507
      %v2513 = vunpack.c.l.b16 %v2508
      %v2514 = vunpack.c.h.b16 %v2508
      %v2515 = vpack.c.b16 %v2511, %v2511
      %v2516 = vpack.c.b16 %v2512, %v2512
      %v2517 = vpack.c.b16 %v2513, %v2513
      %v2518 = vpack.c.b16 %v2514, %v2514
      %v2520 = vpack.i.b16 %v2515, %v2515
      %v2522 = vlaneseq
      %v2523 = vshrl.u32 %v2522, 7
      %v2524 = vsub.s32 0, %v2523
      %v2525 = vrot.slane %v2520, %v2524
      %v2527 = vpack.i.b16 %v2516, %v2516
      %v2529 = vlaneseq
      %v2530 = vshrl.u32 %v2529, 7
      %v2531 = vsub.s32 0, %v2530
      %v2532 = vrot.slane %v2527, %v2531
      %v2534 = vpack.i.b16 %v2517, %v2517
      %v2536 = vlaneseq
      %v2537 = vshrl.u32 %v2536, 7
      %v2538 = vsub.s32 0, %v2537
      %v2539 = vrot.slane %v2534, %v2538
      %v2541 = vpack.i.b16 %v2518, %v2518
      %v2543 = vlaneseq
      %v2544 = vshrl.u32 %v2543, 7
      %v2545 = vsub.s32 0, %v2544
      %v2546 = vrot.slane %v2541, %v2545
      %2551 = vrot.lane.b32.xlu0 %v2525, 17
      %v2552 = vpop.permute.xlu0 %2551
      %2553 = vrot.lane.b32.xlu0 %v2532, 17
      %v2554 = vpop.permute.xlu0 %2553
      %2555 = vrot.lane.b32.xlu0 %v2539, 17
      %v2556 = vpop.permute.xlu0 %2555
      %2557 = vrot.lane.b32.xlu0 %v2546, 17
      %v2558 = vpop.permute.xlu0 %2557
      %v2559 = vsel %vm1611, %v2552, %v2554
      %v2560 = vsel %vm1611, %v2554, %v2556
      %v2561 = vsel %vm1611, %v2556, %v2558
      %v2567 = vmul.bf16 %v2315, %v2552
      %v2568 = vmul.bf16 %v2316, %v2559
      %v2569 = vmul.bf16 %v2317, %v2560
      %v2570 = vmul.bf16 %v2318, %v2561
      %v2571 = vmul.bf16 %v2319, %v2558
      %2577 = vrot.lane.b32.xlu0 %v2192, 127
      %v2578 = vpop.permute.xlu0 %2577
      %2579 = vrot.lane.b32.xlu0 %v2193, 127
      %v2580 = vpop.permute.xlu0 %2579
      %2581 = vrot.lane.b32.xlu0 %v2194, 127
      %v2582 = vpop.permute.xlu0 %2581
      %2583 = vrot.lane.b32.xlu0 %v2195, 127
      %v2584 = vpop.permute.xlu0 %2583
      %2585 = vrot.lane.b32.xlu0 %v2196, 127
      %v2586 = vpop.permute.xlu0 %2585
      %v2587 = vsel %vm755, %v2578, %v2580
      %v2588 = vsel %vm755, %v2580, %v2582
      %v2589 = vsel %vm755, %v2582, %v2584
      %v2590 = vsel %vm755, %v2584, %v2586
      %2596 = vrot.lane.b32.xlu0 %v2257, 126
      %v2597 = vpop.permute.xlu0 %2596
      %2598 = vrot.lane.b32.xlu0 %v2258, 126
      %v2599 = vpop.permute.xlu0 %2598
      %2600 = vrot.lane.b32.xlu0 %v2259, 126
      %v2601 = vpop.permute.xlu0 %2600
      %2602 = vrot.lane.b32.xlu0 %v2260, 126
      %v2603 = vpop.permute.xlu0 %2602
      %2604 = vrot.lane.b32.xlu0 %v2261, 126
      %v2605 = vpop.permute.xlu0 %2604
      %v2606 = vsel %vm763, %v2597, %v2599
      %v2607 = vsel %vm763, %v2599, %v2601
      %v2608 = vsel %vm763, %v2601, %v2603
      %v2609 = vsel %vm763, %v2603, %v2605
      %2615 = vrot.lane.b32.xlu0 %v2310, 112
      %v2616 = vpop.permute.xlu0 %2615
      %2617 = vrot.lane.b32.xlu0 %v2311, 112
      %v2618 = vpop.permute.xlu0 %2617
      %2619 = vrot.lane.b32.xlu0 %v2312, 112
      %v2620 = vpop.permute.xlu0 %2619
      %2621 = vrot.lane.b32.xlu0 %v2313, 112
      %v2622 = vpop.permute.xlu0 %2621
      %2623 = vrot.lane.b32.xlu0 %v2314, 112
      %v2624 = vpop.permute.xlu0 %2623
      %v2625 = vsel %vm1231, %v2616, %v2618
      %v2626 = vsel %vm1231, %v2618, %v2620
      %v2627 = vsel %vm1231, %v2620, %v2622
      %v2628 = vsel %vm1231, %v2622, %v2624
      %2633 = vrot.lane.b32.xlu0 %v2075, 111
      %v2634 = vpop.permute.xlu0 %2633
      %2635 = vrot.lane.b32.xlu0 %v2076, 111
      %v2636 = vpop.permute.xlu0 %2635
      %2637 = vrot.lane.b32.xlu0 %v2077, 111
      %v2638 = vpop.permute.xlu0 %2637
      %2639 = vrot.lane.b32.xlu0 %v2078, 111
      %v2640 = vpop.permute.xlu0 %2639
      %v2641 = vsel %vm1177, %v2634, %v2636
      %v2642 = vsel %vm1177, %v2636, %v2638
      %v2643 = vsel %vm1177, %v2638, %v2640
      %2649 = vrot.lane.b32.xlu0 %v2384, 110
      %v2650 = vpop.permute.xlu0 %2649
      %2651 = vrot.lane.b32.xlu0 %v2385, 110
      %v2652 = vpop.permute.xlu0 %2651
      %2653 = vrot.lane.b32.xlu0 %v2386, 110
      %v2654 = vpop.permute.xlu0 %2653
      %2655 = vrot.lane.b32.xlu0 %v2387, 110
      %v2656 = vpop.permute.xlu0 %2655
      %2657 = vrot.lane.b32.xlu0 %v2388, 110
      %v2658 = vpop.permute.xlu0 %2657
      %v2659 = vsel %vm1712, %v2650, %v2652
      %v2660 = vsel %vm1712, %v2652, %v2654
      %v2661 = vsel %vm1712, %v2654, %v2656
      %v2662 = vsel %vm1712, %v2656, %v2658
      %2668 = vrot.lane.b32.xlu0 %v2449, 96
      %v2669 = vpop.permute.xlu0 %2668
      %2670 = vrot.lane.b32.xlu0 %v2450, 96
      %v2671 = vpop.permute.xlu0 %2670
      %2672 = vrot.lane.b32.xlu0 %v2451, 96
      %v2673 = vpop.permute.xlu0 %2672
      %2674 = vrot.lane.b32.xlu0 %v2452, 96
      %v2675 = vpop.permute.xlu0 %2674
      %2676 = vrot.lane.b32.xlu0 %v2453, 96
      %v2677 = vpop.permute.xlu0 %2676
      %v2678 = vsel %vm1732, %v2669, %v2671
      %v2679 = vsel %vm1732, %v2671, %v2673
      %v2680 = vsel %vm1732, %v2673, %v2675
      %v2681 = vsel %vm1732, %v2675, %v2677
      %2687 = vrot.lane.b32.xlu0 %v2502, 95
      %v2688 = vpop.permute.xlu0 %2687
      %2689 = vrot.lane.b32.xlu0 %v2503, 95
      %v2690 = vpop.permute.xlu0 %2689
      %2691 = vrot.lane.b32.xlu0 %v2504, 95
      %v2692 = vpop.permute.xlu0 %2691
      %2693 = vrot.lane.b32.xlu0 %v2505, 95
      %v2694 = vpop.permute.xlu0 %2693
      %2695 = vrot.lane.b32.xlu0 %v2506, 95
      %v2696 = vpop.permute.xlu0 %2695
      %v2697 = vsel %vm1752, %v2688, %v2690
      %v2698 = vsel %vm1752, %v2690, %v2692
      %v2699 = vsel %vm1752, %v2692, %v2694
      %v2700 = vsel %vm1752, %v2694, %v2696
      %2706 = vrot.lane.b32.xlu0 %v2567, 94
      %v2707 = vpop.permute.xlu0 %2706
      %2708 = vrot.lane.b32.xlu0 %v2568, 94
      %v2709 = vpop.permute.xlu0 %2708
      %2710 = vrot.lane.b32.xlu0 %v2569, 94
      %v2711 = vpop.permute.xlu0 %2710
      %2712 = vrot.lane.b32.xlu0 %v2570, 94
      %v2713 = vpop.permute.xlu0 %2712
      %2714 = vrot.lane.b32.xlu0 %v2571, 94
      %v2715 = vpop.permute.xlu0 %2714
      %v2716 = vsel %vm1772, %v2707, %v2709
      %v2717 = vsel %vm1772, %v2709, %v2711
      %v2718 = vsel %vm1772, %v2711, %v2713
      %v2719 = vsel %vm1772, %v2713, %v2715
      %s2720 = scalar_lea.vmem %s3, 32
      %v2721 = vld [vmem:[%s2720] sm:$0xff]
      %v2722 = vld [vmem:[%s2720 + $0x8] sm:$0xff]
      %s2723 = scalar_lea.vmem %s4, 32
      %v2724 = vld [vmem:[%s2723] sm:$0xff]
      %v2725 = vld [vmem:[%s2723 + $0x8] sm:$0xff]
      %2727 = vset.pattern.permute.xlu0 0
      %2728 = vperm.xlu0 %2727, %v2724
      %v2729 = vpop.permute.xlu0 %2728
      %2732 = vset.pattern.permute.xlu0 0
      %2733 = vperm.xlu0 %2732, %v2725
      %v2734 = vpop.permute.xlu0 %2733
      %v2738 = vunpack.c.l.b16 %v2721
      %v2739 = vunpack.c.h.b16 %v2721
      %v2740 = vunpack.c.l.b16 %v2722
      %v2741 = vunpack.c.h.b16 %v2722
      %v2742 = vpack.c.b16 %v2740, %v2738
      %v2743 = vpack.c.b16 %v2741, %v2739
      %2750 = vrot.lane.b32.xlu0 %v2139, 17
      %v2751 = vpop.permute.xlu0 %2750
      %2752 = vrot.lane.b32.xlu0 %v2140, 17
      %v2753 = vpop.permute.xlu0 %2752
      %2754 = vrot.lane.b32.xlu0 %v2141, 17
      %v2755 = vpop.permute.xlu0 %2754
      %2756 = vrot.lane.b32.xlu0 %v2142, 17
      %v2757 = vpop.permute.xlu0 %2756
      %2758 = vrot.lane.b32.xlu0 %v2143, 17
      %v2759 = vpop.permute.xlu0 %2758
      %2760 = vrot.lane.b32.xlu0 %v2587, 17
      %v2761 = vpop.permute.xlu0 %2760
      %2762 = vrot.lane.b32.xlu0 %v2588, 17
      %v2763 = vpop.permute.xlu0 %2762
      %2764 = vrot.lane.b32.xlu0 %v2589, 17
      %v2765 = vpop.permute.xlu0 %2764
      %2766 = vrot.lane.b32.xlu0 %v2590, 17
      %v2767 = vpop.permute.xlu0 %2766
      %2768 = vrot.lane.b32.xlu0 %v2586, 17
      %v2769 = vpop.permute.xlu0 %2768
      %2770 = vrot.lane.b32.xlu0 %v2606, 17
      %v2771 = vpop.permute.xlu0 %2770
      %2772 = vrot.lane.b32.xlu0 %v2607, 17
      %v2773 = vpop.permute.xlu0 %2772
      %2774 = vrot.lane.b32.xlu0 %v2608, 17
      %v2775 = vpop.permute.xlu0 %2774
      %2776 = vrot.lane.b32.xlu0 %v2609, 17
      %v2777 = vpop.permute.xlu0 %2776
      %2778 = vrot.lane.b32.xlu0 %v2605, 17
      %v2779 = vpop.permute.xlu0 %2778
      %2780 = vrot.lane.b32.xlu0 %v2625, 17
      %v2781 = vpop.permute.xlu0 %2780
      %2782 = vrot.lane.b32.xlu0 %v2626, 17
      %v2783 = vpop.permute.xlu0 %2782
      %2784 = vrot.lane.b32.xlu0 %v2627, 17
      %v2785 = vpop.permute.xlu0 %2784
      %2786 = vrot.lane.b32.xlu0 %v2628, 17
      %v2787 = vpop.permute.xlu0 %2786
      %2788 = vrot.lane.b32.xlu0 %v2624, 17
      %v2789 = vpop.permute.xlu0 %2788
      %2790 = vrot.lane.b32.xlu0 %v2634, 17
      %v2791 = vpop.permute.xlu0 %2790
      %2792 = vrot.lane.b32.xlu0 %v2641, 17
      %v2793 = vpop.permute.xlu0 %2792
      %2794 = vrot.lane.b32.xlu0 %v2642, 17
      %v2795 = vpop.permute.xlu0 %2794
      %2796 = vrot.lane.b32.xlu0 %v2643, 17
      %v2797 = vpop.permute.xlu0 %2796
      %2798 = vrot.lane.b32.xlu0 %v2640, 17
      %v2799 = vpop.permute.xlu0 %2798
      %2800 = vrot.lane.b32.xlu0 %v2650, 17
      %v2801 = vpop.permute.xlu0 %2800
      %2802 = vrot.lane.b32.xlu0 %v2659, 17
      %v2803 = vpop.permute.xlu0 %2802
      %2804 = vrot.lane.b32.xlu0 %v2660, 17
      %v2805 = vpop.permute.xlu0 %2804
      %2806 = vrot.lane.b32.xlu0 %v2661, 17
      %v2807 = vpop.permute.xlu0 %2806
      %2808 = vrot.lane.b32.xlu0 %v2662, 17
      %v2809 = vpop.permute.xlu0 %2808
      %2810 = vrot.lane.b32.xlu0 %v2669, 17
      %v2811 = vpop.permute.xlu0 %2810
      %2812 = vrot.lane.b32.xlu0 %v2678, 17
      %v2813 = vpop.permute.xlu0 %2812
      %2814 = vrot.lane.b32.xlu0 %v2679, 17
      %v2815 = vpop.permute.xlu0 %2814
      %2816 = vrot.lane.b32.xlu0 %v2680, 17
      %v2817 = vpop.permute.xlu0 %2816
      %2818 = vrot.lane.b32.xlu0 %v2681, 17
      %v2819 = vpop.permute.xlu0 %2818
      %2820 = vrot.lane.b32.xlu0 %v2688, 17
      %v2821 = vpop.permute.xlu0 %2820
      %2822 = vrot.lane.b32.xlu0 %v2697, 17
      %v2823 = vpop.permute.xlu0 %2822
      %2824 = vrot.lane.b32.xlu0 %v2698, 17
      %v2825 = vpop.permute.xlu0 %2824
      %2826 = vrot.lane.b32.xlu0 %v2699, 17
      %v2827 = vpop.permute.xlu0 %2826
      %2828 = vrot.lane.b32.xlu0 %v2700, 17
      %v2829 = vpop.permute.xlu0 %2828
      %2830 = vrot.lane.b32.xlu0 %v2707, 17
      %v2831 = vpop.permute.xlu0 %2830
      %2832 = vrot.lane.b32.xlu0 %v2716, 17
      %v2833 = vpop.permute.xlu0 %2832
      %2834 = vrot.lane.b32.xlu0 %v2717, 17
      %v2835 = vpop.permute.xlu0 %2834
      %2836 = vrot.lane.b32.xlu0 %v2718, 17
      %v2837 = vpop.permute.xlu0 %2836
      %2838 = vrot.lane.b32.xlu0 %v2719, 17
      %v2839 = vpop.permute.xlu0 %2838
      %v2840 = vsel %vm1611, %v2751, %v2753
      %v2841 = vsel %vm1611, %v2753, %v2755
      %v2842 = vsel %vm1611, %v2755, %v2757
      %v2843 = vsel %vm1611, %v2757, %v2759
      %v2844 = vsel %vm1611, %v2761, %v2763
      %v2845 = vsel %vm1611, %v2763, %v2765
      %v2846 = vsel %vm1611, %v2765, %v2767
      %v2847 = vsel %vm1611, %v2767, %v2769
      %v2848 = vsel %vm1611, %v2771, %v2773
      %v2849 = vsel %vm1611, %v2773, %v2775
      %v2850 = vsel %vm1611, %v2775, %v2777
      %v2851 = vsel %vm1611, %v2777, %v2779
      %v2852 = vsel %vm1611, %v2781, %v2783
      %v2853 = vsel %vm1611, %v2783, %v2785
      %v2854 = vsel %vm1611, %v2785, %v2787
      %v2855 = vsel %vm1611, %v2787, %v2789
      %v2856 = vsel %vm1611, %v2791, %v2793
      %v2857 = vsel %vm1611, %v2793, %v2795
      %v2858 = vsel %vm1611, %v2795, %v2797
      %v2859 = vsel %vm1611, %v2797, %v2799
      %v2860 = vsel %vm1611, %v2801, %v2803
      %v2861 = vsel %vm1611, %v2803, %v2805
      %v2862 = vsel %vm1611, %v2805, %v2807
      %v2863 = vsel %vm1611, %v2807, %v2809
      %v2864 = vsel %vm1611, %v2811, %v2813
      %v2865 = vsel %vm1611, %v2813, %v2815
      %v2866 = vsel %vm1611, %v2815, %v2817
      %v2867 = vsel %vm1611, %v2817, %v2819
      %v2868 = vsel %vm1611, %v2821, %v2823
      %v2869 = vsel %vm1611, %v2823, %v2825
      %v2870 = vsel %vm1611, %v2825, %v2827
      %v2871 = vsel %vm1611, %v2827, %v2829
      %v2872 = vsel %vm1611, %v2831, %v2833
      %v2873 = vsel %vm1611, %v2833, %v2835
      %v2874 = vsel %vm1611, %v2835, %v2837
      %v2875 = vsel %vm1611, %v2837, %v2839
      %v2913 = vsel %vm853, %v2743, 0
      %2915 = vmatprep.subr.bf16.mxu0 %v2841
      %2916 = vmatpush1.bf16.msra.mxu0 %v2840
      %2917 = vmatprep.subr.bf16.mxu0 %v2845
      %2918 = vmatpush1.bf16.msra.mxu0 %v2844
      %2919 = vmatprep.subr.bf16.mxu0 %v2849
      %2920 = vmatpush1.bf16.msra.mxu0 %v2848
      %2921 = vmatprep.subr.bf16.mxu0 %v2853
      %2922 = vmatpush1.bf16.msra.mxu0 %v2852
      %2923 = vmatprep.subr.bf16.mxu0 %v2857
      %2924 = vmatpush1.bf16.msra.mxu0 %v2856
      %2925 = vmatprep.subr.bf16.mxu0 %v2861
      %2926 = vmatpush1.bf16.msra.mxu0 %v2860
      %2927 = vmatprep.subr.bf16.mxu0 %v2865
      %2928 = vmatpush1.bf16.msra.mxu0 %v2864
      %2929 = vmatprep.subr.bf16.mxu0 %v2869
      %2930 = vmatpush1.bf16.msra.mxu0 %v2868
      %2931 = vmatprep.subr.bf16.mxu0 %v2873
      %2932 = vmatpush1.bf16.msra.mxu0 %v2872
      %2933 = vmatprep.subr.bf16.mxu0 0
      %2934 = vmatpush1.bf16.msra.mxu0 0
      %2935 = vmatprep.subr.bf16.mxu0 0
      %2936 = vmatpush1.bf16.msra.mxu0 0
      %2937 = vmatprep.subr.bf16.mxu0 0
      %2938 = vmatpush1.bf16.msra.mxu0 0
      %2939 = vmatprep.subr.bf16.mxu0 0
      %2940 = vmatpush1.bf16.msra.mxu0 0
      %2941 = vmatprep.subr.bf16.mxu0 0
      %2942 = vmatpush1.bf16.msra.mxu0 0
      %2943 = vmatprep.subr.bf16.mxu0 0
      %2944 = vmatpush1.bf16.msra.mxu0 0
      %2945 = vmatprep.subr.bf16.mxu0 0
      %2946 = vmatpush1.bf16.msra.mxu0 0
      %2947 = vmatprep.mubr.bf16.mxu0 %v2913
      %2948 = vmatmul.mubr.bf16.gmra.mrb[0].mxu0 %v2742
      %v2949 = vpop.f32.mrb[0].mxu0
      %v2950 = vadd.f32 %v2729, %v2949
      %v2951 = vpop.f32.mrb[0].mxu0
      %v2952 = vadd.f32 %v2729, %v2951
      %v2953 = vpop.f32.mrb[0].mxu0
      %v2954 = vadd.f32 %v2734, %v2953
      %v2955 = vpop.f32.mrb[0].mxu0
      %v2956 = vadd.f32 %v2734, %v2955
      %2957 = vdwg.mxu0
      %2958 = vmatprep.subr.bf16.mxu0 %v2843
      %2959 = vmatpush1.bf16.msra.mxu0 %v2842
      %2960 = vmatprep.subr.bf16.mxu0 %v2847
      %2961 = vmatpush1.bf16.msra.mxu0 %v2846
      %2962 = vmatprep.subr.bf16.mxu0 %v2851
      %2963 = vmatpush1.bf16.msra.mxu0 %v2850
      %2964 = vmatprep.subr.bf16.mxu0 %v2855
      %2965 = vmatpush1.bf16.msra.mxu0 %v2854
      %2966 = vmatprep.subr.bf16.mxu0 %v2859
      %2967 = vmatpush1.bf16.msra.mxu0 %v2858
      %2968 = vmatprep.subr.bf16.mxu0 %v2863
      %2969 = vmatpush1.bf16.msra.mxu0 %v2862
      %2970 = vmatprep.subr.bf16.mxu0 %v2867
      %2971 = vmatpush1.bf16.msra.mxu0 %v2866
      %2972 = vmatprep.subr.bf16.mxu0 %v2871
      %2973 = vmatpush1.bf16.msra.mxu0 %v2870
      %2974 = vmatprep.subr.bf16.mxu0 %v2875
      %2975 = vmatpush1.bf16.msra.mxu0 %v2874
      %2976 = vmatprep.subr.bf16.mxu0 0
      %2977 = vmatpush1.bf16.msra.mxu0 0
      %2978 = vmatprep.subr.bf16.mxu0 0
      %2979 = vmatpush1.bf16.msra.mxu0 0
      %2980 = vmatprep.subr.bf16.mxu0 0
      %2981 = vmatpush1.bf16.msra.mxu0 0
      %2982 = vmatprep.subr.bf16.mxu0 0
      %2983 = vmatpush1.bf16.msra.mxu0 0
      %2984 = vmatprep.subr.bf16.mxu0 0
      %2985 = vmatpush1.bf16.msra.mxu0 0
      %2986 = vmatprep.subr.bf16.mxu0 0
      %2987 = vmatpush1.bf16.msra.mxu0 0
      %2988 = vmatprep.subr.bf16.mxu0 0
      %2989 = vmatpush1.bf16.msra.mxu0 0
      %2990 = vmatprep.mubr.bf16.mxu0 %v2913
      %2991 = vmatmul.mubr.bf16.gmra.mrb[0].mxu0 %v2742
      %v2992 = vpop.f32.mrb[0].mxu0
      %v2993 = vadd.f32 %v2729, %v2992
      %v2994 = vpop.f32.mrb[0].mxu0
      %v2995 = vadd.f32 %v2729, %v2994
      %v2996 = vpop.f32.mrb[0].mxu0
      %v2997 = vadd.f32 %v2734, %v2996
      %v2998 = vpop.f32.mrb[0].mxu0
      %v2999 = vadd.f32 %v2734, %v2998
      %3000 = vdwg.mxu0
      %vm3001 = vcmp.ge.f32.partialorder %v2950, 0.0
      %vm3002 = vcmp.ge.f32.partialorder %v2952, 0.0
      %vm3003 = vcmp.ge.f32.partialorder %v2993, 0.0
      %vm3004 = vcmp.ge.f32.partialorder %v2995, 0.0
      %vm3005 = vcmp.ge.f32.partialorder %v2954, 0.0
      %vm3006 = vcmp.ge.f32.partialorder %v2956, 0.0
      %vm3007 = vcmp.ge.f32.partialorder %v2997, 0.0
      %vm3008 = vcmp.ge.f32.partialorder %v2999, 0.0
      %v3009 = vmul.f32 %v2950, 0.2
      %v3010 = vmul.f32 %v2952, 0.2
      %v3011 = vmul.f32 %v2993, 0.2
      %v3012 = vmul.f32 %v2995, 0.2
      %v3013 = vmul.f32 %v2954, 0.2
      %v3014 = vmul.f32 %v2956, 0.2
      %v3015 = vmul.f32 %v2997, 0.2
      %v3016 = vmul.f32 %v2999, 0.2
      %v3017 = vsel %vm3001, %v2950, %v3009
      %v3018 = vsel %vm3002, %v2952, %v3010
      %v3019 = vsel %vm3003, %v2993, %v3011
      %v3020 = vsel %vm3004, %v2995, %v3012
      %v3021 = vsel %vm3005, %v2954, %v3013
      %v3022 = vsel %vm3006, %v2956, %v3014
      %v3023 = vsel %vm3007, %v2997, %v3015
      %v3024 = vsel %vm3008, %v2999, %v3016
      %3025 = vst [vmem:[%s278] sm:$0xff] %v3017
      %3026 = vst [vmem:[%s278 + $0x8] sm:$0xff] %v3018
      %3027 = vst [vmem:[%s278 + $0x10] sm:$0xff] %v3019
      %3028 = vst [vmem:[%s278 + $0x18] sm:$0xff] %v3020
      %3029 = vst [vmem:[%s278 + $0x20] sm:$0xff] %v3021
      %3030 = vst [vmem:[%s278 + $0x28] sm:$0xff] %v3022
      %3031 = vst [vmem:[%s278 + $0x30] sm:$0xff] %v3023
      %3032 = vst [vmem:[%s278 + $0x38] sm:$0xff] %v3024
      %p3033 = scmp.lt.s32.totalorder %s18, 1
      %s3034 = scalar_select %p3033, %s18, 1
      %s3035 = smul.addr %s3034, 8
      %s3036 = smul.addr %s3035, 8
      %s3037 = scalar_lea.vmem %s7, %s3036
      // Predicated region
      $region49: #{scconv_forward.1} parent=47 // pred_check
        %p3038 = pneg %p188
      $region50: #{scconv_forward.1} parent=47 // pred_check_branch
        %3040 = sbr.rel (%p3038) target = $region52
      $region51: #{scconv_forward.1} parent=47 // pred_region
        _
      $region52: #{scconv_forward.1} parent=47 // pred_fallthru
        _
    $region48: #{scconv_forward.1} parent=5 // pred_fallthru
      _
    %p3041 = scmp.le.s32.totalorder 2, %s13
    // Predicated region
    $region53: #{scconv_forward.1} parent=5 // pred_check
      %p3042 = pneg %p3041
    $region54: #{scconv_forward.1} parent=5 // pred_check_branch
      %3044 = sbr.rel (%p3042) target = $region56
    $region55: #{scconv_forward.1} parent=5 // pred_region
      %s3045 = ssub.s32 %s13, 2
      // Predicated region
      $region57: #{scconv_forward.1} parent=55 // pred_check
        %p3046 = pneg %p194
      $region58: #{scconv_forward.1} parent=55 // pred_check_branch
        %3048 = sbr.rel (%p3046) target = $region60
      $region59: #{scconv_forward.1} parent=55 // pred_region
        %p3049 = scmp.lt.s32.totalorder %s19, 1
        %s3050 = scalar_select %p3049, %s19, 1
        %s3051 = smul.addr %s3050, 8
        %s3052 = smul.addr %s3051, 8
        %s3053 = scalar_lea.vmem %s7, %s3052
      $region60: #{scconv_forward.1} parent=55 // pred_fallthru
        _
    $region56: #{scconv_forward.1} parent=5 // pred_fallthru
      _
  $region6: #{scconv_forward.1} parent=0 // loop_footer
    %s17 = sadd.s32 1, %s13
  $region7: #{scconv_forward.1} parent=0 // loop_footer_branch
    %12 = sbr.rel target = $region3
  $region8: #{scconv_forward.1} parent=0 // loop_exit
    _

</llo_original>
